<compile_context>
chip_gen: v6e
topology: v6e:2x2x1
jax: 0.10.0
libtpu: 0.0.40
codegen_flags: <defaults>
</compile_context>

<pallas_src>
import functools

import numpy as np

import jax
import jax.numpy as jnp
from jax import lax
from jax.experimental import pallas as pl
from jax.experimental.pallas import tpu as pltpu


def _group_same_conv_kernel(x_ref, w_ref, m_ref, b_ref, o_ref, *,
                            W, KH, KW, padding, mxu_dtype):
    # x_ref: (N, Cin_g, L)       one group's input channels, spatial flattened, L = H*W
    # w_ref: (T, max_ch, Cin_g)  tap-major weights (T = KH*KW), already in MXU dtype
    # m_ref: (T, 1, L)           f32 0/1 halo masks, one per tap
    # b_ref: (max_ch, 1)         f32 bias of this group (zeros if the module has no bias)
    # o_ref: (N, max_ch, L)      this group's output block (lane-dense)
    N, Cin_g, L = x_ref.shape
    max_ch = w_ref.shape[1]

    x = x_ref[...]
    acc = jnp.zeros((N, max_ch, L), jnp.float32)

    for kh in range(KH):
        for kw in range(KW):
            t = kh * KW + kw
            dh, dw = kh - padding, kw - padding
            off = dh * W + dw
            # Tap (kh, kw) of a stride-1 "same" conv reads input pixel p + off for output
            # pixel p; realize it as a lane rotation of the flattened image.  Positions
            # whose true source lies in the zero halo are killed by the 0/1 mask.
            shifted = x if off == 0 else pltpu.roll(x, shift=(-off) % L, axis=2)
            if dh == 0 and dw == 0:
                patch = shifted
            else:
                patch = shifted * m_ref[t]                      # (N, Cin_g, L), f32 math
            patch = patch.astype(mxu_dtype)

            w_t = jnp.broadcast_to(w_ref[t], (N, max_ch, Cin_g))  # tiny lhs, batched over N
            acc = acc + jnp.einsum("noc,ncl->nol", w_t, patch,
                                   preferred_element_type=jnp.float32)

    acc = acc + b_ref[...][None]          # (1, max_ch, 1) f32 bias, lane-broadcast epilogue
    o_ref[...] = acc.astype(o_ref.dtype)


def adaptive_group_conv(x, weight, bias, output_channels_list, *,
                        stride=1, padding=1, compute_dtype=None):
    """Pallas implementation of AdaptiveGroupConv.forward.

    x:      (N, Cin, H, W)                 NCHW
    weight: (G*max_ch, Cin//G, KH, KW)     PyTorch grouped-conv OIHW weight
    bias:   (G*max_ch,) or None
    compute_dtype: optional MXU operand dtype (e.g. jnp.bfloat16); accumulation stays f32.
    Returns [ (N, ch_i, H, W) for ch_i in output_channels_list ].
    """
    N, Cin, H, W = x.shape
    G = len(output_channels_list)
    max_ch = max(output_channels_list)
    if Cin % G != 0:
        raise ValueError(f"input channels {Cin} not divisible by num groups {G}")
    Cin_g = Cin // G
    KH, KW = int(weight.shape[-2]), int(weight.shape[-1])
    if tuple(weight.shape) != (G * max_ch, Cin_g, KH, KW):
        raise ValueError(f"weight shape {weight.shape} != {(G * max_ch, Cin_g, KH, KW)}")
    if bias is not None and tuple(bias.shape) != (G * max_ch,):
        raise ValueError(f"bias shape {bias.shape} != {(G * max_ch,)}")

    Ho = (H + 2 * padding - KH) // stride + 1
    Wo = (W + 2 * padding - KW) // stride + 1
    if stride != 1 or Ho != H or Wo != W:
        # TODO(synk): general stride / non-"same" padding needs a padded-scratch im2col path;
        # AdaptiveGroupConv in CenterHead uses ksize=3, stride=1, padding=1 (same conv).
        raise NotImplementedError("kernel implements the stride=1 'same' conv configuration")

    L = H * W
    T = KH * KW
    mxu_dtype = jnp.dtype(compute_dtype) if compute_dtype is not None else x.dtype

    # Activation: free reshape only (channels stay grouped exactly like PyTorch grouped conv).
    xg = x.reshape(N, G, Cin_g, L)
    # Weights: (G, T, max_ch, Cin_g), tap-major, cast once to the MXU operand dtype.
    wg = weight.reshape(G, max_ch, Cin_g, KH, KW).transpose(0, 3, 4, 1, 2)
    wg = wg.reshape(G, T, max_ch, Cin_g).astype(mxu_dtype)
    # Bias as a (max_ch, 1) sublane vector per group (f32 epilogue).
    b = jnp.zeros((G * max_ch,), jnp.float32) if bias is None else bias.astype(jnp.float32)
    bg = b.reshape(G, max_ch, 1)

    # Static 0/1 halo masks per tap (trace-time numpy), shared by every group / batch item.
    rows = np.arange(L) // W
    cols = np.arange(L) % W
    masks = np.empty((T, 1, L), np.float32)
    for kh in range(KH):
        for kw in range(KW):
            dh, dw = kh - padding, kw - padding
            valid = ((rows + dh >= 0) & (rows + dh < H) &
                     (cols + dw >= 0) & (cols + dw < W))
            masks[kh * KW + kw, 0] = valid.astype(np.float32)
    masks = jnp.asarray(masks)

    kernel = functools.partial(_group_same_conv_kernel, W=W, KH=KH, KW=KW,
                               padding=padding, mxu_dtype=mxu_dtype)

    y = pl.pallas_call(
        kernel,
        out_shape=jax.ShapeDtypeStruct((N, G, max_ch, L), x.dtype),
        grid=(G,),
        in_specs=[
            pl.BlockSpec((N, None, Cin_g, L), lambda g: (0, g, 0, 0)),
            pl.BlockSpec((None, T, max_ch, Cin_g), lambda g: (g, 0, 0, 0)),
            pl.BlockSpec((T, 1, L), lambda g: (0, 0, 0)),
            pl.BlockSpec((None, max_ch, 1), lambda g: (g, 0, 0)),
        ],
        out_specs=pl.BlockSpec((N, None, max_ch, L), lambda g: (0, g, 0, 0)),
        compiler_params=pltpu.CompilerParams(
            dimension_semantics=("parallel",),
        ),
    )(xg, wg, masks, bg)

    # Free reshape back to spatial; per-group channel slicing as in the PyTorch module.
    y = y.reshape(N, G, max_ch, H, W)
    return [y[:, i, :ch] for i, ch in enumerate(output_channels_list)]


if __name__ == "__main__":
    # Module config (matches AdaptiveGroupConv.__init__ semantics):
    #   input_channels=4, output_channels_list=[2, 3], ksize=3, stride=1, padding=1, bias=True
    input_channels = 4
    output_channels_list = [2, 3]
    ksize, stride, padding = 3, 1, 1
    G = len(output_channels_list)
    max_ch = max(output_channels_list)
    cin_g = input_channels // G

    N, H, W = 2, 16, 16

    key = jax.random.PRNGKey(0)
    kx, kw = jax.random.split(key)

    x = jax.random.normal(kx, (N, input_channels, H, W), dtype=jnp.float32)

    # Deterministic kaiming-like init (normal * sqrt(2 / fan_in)); bias filled with 0.1.
    fan_in = cin_g * ksize * ksize
    weight = (
        jax.random.normal(kw, (G * max_ch, cin_g, ksize, ksize), dtype=jnp.float32)
        * jnp.sqrt(2.0 / fan_in)
    )
    bias = jnp.full((G * max_ch,), 0.1, dtype=jnp.float32)

    # Reference: XLA grouped conv + bias, sliced exactly like the PyTorch module.
    y_ref = (
        lax.conv_general_dilated(
            x, weight,
            window_strides=(stride, stride),
            padding=[(padding, padding), (padding, padding)],
            dimension_numbers=("NCHW", "OIHW", "NCHW"),
            feature_group_count=G,
        )
        + bias[None, :, None, None]
    )
    refs = [
        y_ref[:, i * max_ch: i * max_ch + ch]
        for i, ch in enumerate(output_channels_list)
    ]

    # f32 MXU path (tight tolerance).
    outs = adaptive_group_conv(
        x, weight, bias, output_channels_list, stride=stride, padding=padding
    )
    outs = jax.block_until_ready(outs)
    for o, r in zip(outs, refs):
        assert o.shape == r.shape, (o.shape, r.shape)
        assert jnp.allclose(o, r, rtol=1e-4, atol=1e-4), float(jnp.max(jnp.abs(o - r)))

    # bf16 MXU-operand path (f32 accumulation / epilogue), looser tolerance.
    outs_bf16 = adaptive_group_conv(
        x, weight, bias, output_channels_list, stride=stride, padding=padding,
        compute_dtype=jnp.bfloat16,
    )
    outs_bf16 = jax.block_until_ready(outs_bf16)
    for o, r in zip(outs_bf16, refs):
        assert o.shape == r.shape, (o.shape, r.shape)
        assert jnp.allclose(o, r, rtol=5e-2, atol=5e-2), float(jnp.max(jnp.abs(o - r)))

    print("KERNEL_OK")
</pallas_src>

<mosaic_0001>
module attributes {stable_mosaic.version = 11 : i64} {
  func.func @_group_same_conv_kernel(%arg0: i32, %arg1: memref<2x1x2x256xf32, #tpu.memory_space<vmem>>, %arg2: memref<1x9x3x2xf32, #tpu.memory_space<vmem>>, %arg3: memref<9x1x256xf32, #tpu.memory_space<vmem>>, %arg4: memref<1x3x1xf32, #tpu.memory_space<vmem>>, %arg5: memref<2x1x3x256xf32, #tpu.memory_space<vmem>>) attributes {dimension_semantics = [#tpu.dimension_semantics<parallel>], iteration_bounds = array<i64: 2>, scalar_prefetch = 0 : i64, scratch_operands = 0 : i64, tpu.core_type = #tpu.core_type<tc>, window_params = [{transform_indices = @transform_0, window_bounds = array<i64: 2, 1, 2, 256>}, {transform_indices = @transform_1, window_bounds = array<i64: 1, 9, 3, 2>}, {pipeline_mode = #tpu.pipeline_mode<synchronous>, transform_indices = @transform_2, window_bounds = array<i64: 9, 1, 256>}, {transform_indices = @transform_3, window_bounds = array<i64: 1, 3, 1>}, {transform_indices = @transform_4, window_bounds = array<i64: 2, 1, 3, 256>}]} {
    %c0 = arith.constant 0 : index
    %c0_0 = arith.constant 0 : index
    %c0_1 = arith.constant 0 : index
    %c0_2 = arith.constant 0 : index
    %0 = vector.load %arg1[%c0, %c0_0, %c0_1, %c0_2] : memref<2x1x2x256xf32, #tpu.memory_space<vmem>>, vector<2x1x2x256xf32>
    %1 = vector.shape_cast %0 : vector<2x1x2x256xf32> to vector<2x2x256xf32>
    %cst = arith.constant 0.000000e+00 : f32
    %2 = vector.broadcast %cst : f32 to vector<2x3x256xf32>
    %c17_i32 = arith.constant 17 : i32
    %3 = tpu.dynamic_rotate %1 by %c17_i32 dim 2 : vector<2x2x256xf32>, i32 -> vector<2x2x256xf32>
    %c0_3 = arith.constant 0 : index
    %c0_4 = arith.constant 0 : index
    %c0_5 = arith.constant 0 : index
    %4 = vector.load %arg3[%c0_3, %c0_4, %c0_5] : memref<9x1x256xf32, #tpu.memory_space<vmem>>, vector<1x1x256xf32>
    %5 = vector.shape_cast %4 : vector<1x1x256xf32> to vector<1x256xf32>
    %6 = vector.shape_cast %5 : vector<1x256xf32> to vector<1x1x256xf32>
    %7 = vector.broadcast %6 : vector<1x1x256xf32> to vector<2x2x256xf32>
    %8 = arith.mulf %3, %7 : vector<2x2x256xf32>
    %c0_6 = arith.constant 0 : index
    %c0_7 = arith.constant 0 : index
    %c0_8 = arith.constant 0 : index
    %c0_9 = arith.constant 0 : index
    %9 = vector.load %arg2[%c0_6, %c0_7, %c0_8, %c0_9] : memref<1x9x3x2xf32, #tpu.memory_space<vmem>>, vector<1x1x3x2xf32>
    %10 = vector.shape_cast %9 : vector<1x1x3x2xf32> to vector<3x2xf32>
    %11 = vector.shape_cast %10 : vector<3x2xf32> to vector<1x3x2xf32>
    %12 = vector.broadcast %11 : vector<1x3x2xf32> to vector<2x3x2xf32>
    "tpu.trace_start"() <{level = 10 : i32, message = "noc,ncl->nol"}> : () -> ()
    %cst_10 = arith.constant dense<0.000000e+00> : vector<2x3x256xf32>
    %13 = tpu.matmul %12, %8, %cst_10 {dimension_numbers = #tpu.dot_dimension_numbers<[2], [1], [1], [2], [0, 0, 0, 1, 1, 2], [0], [0]>} : vector<2x3x2xf32>, vector<2x2x256xf32>, vector<2x3x256xf32> -> vector<2x3x256xf32>
    "tpu.trace_stop"() : () -> ()
    %14 = arith.addf %2, %13 : vector<2x3x256xf32>
    %c16_i32 = arith.constant 16 : i32
    %15 = tpu.dynamic_rotate %1 by %c16_i32 dim 2 : vector<2x2x256xf32>, i32 -> vector<2x2x256xf32>
    %c1 = arith.constant 1 : index
    %c0_11 = arith.constant 0 : index
    %c0_12 = arith.constant 0 : index
    %16 = vector.load %arg3[%c1, %c0_11, %c0_12] : memref<9x1x256xf32, #tpu.memory_space<vmem>>, vector<1x1x256xf32>
    %17 = vector.shape_cast %16 : vector<1x1x256xf32> to vector<1x256xf32>
    %18 = vector.shape_cast %17 : vector<1x256xf32> to vector<1x1x256xf32>
    %19 = vector.broadcast %18 : vector<1x1x256xf32> to vector<2x2x256xf32>
    %20 = arith.mulf %15, %19 : vector<2x2x256xf32>
    %c0_13 = arith.constant 0 : index
    %c1_14 = arith.constant 1 : index
    %c0_15 = arith.constant 0 : index
    %c0_16 = arith.constant 0 : index
    %21 = vector.load %arg2[%c0_13, %c1_14, %c0_15, %c0_16] : memref<1x9x3x2xf32, #tpu.memory_space<vmem>>, vector<1x1x3x2xf32>
    %22 = vector.shape_cast %21 : vector<1x1x3x2xf32> to vector<3x2xf32>
    %23 = vector.shape_cast %22 : vector<3x2xf32> to vector<1x3x2xf32>
    %24 = vector.broadcast %23 : vector<1x3x2xf32> to vector<2x3x2xf32>
    "tpu.trace_start"() <{level = 10 : i32, message = "noc,ncl->nol"}> : () -> ()
    %cst_17 = arith.constant dense<0.000000e+00> : vector<2x3x256xf32>
    %25 = tpu.matmul %24, %20, %cst_17 {dimension_numbers = #tpu.dot_dimension_numbers<[2], [1], [1], [2], [0, 0, 0, 1, 1, 2], [0], [0]>} : vector<2x3x2xf32>, vector<2x2x256xf32>, vector<2x3x256xf32> -> vector<2x3x256xf32>
    "tpu.trace_stop"() : () -> ()
    %26 = arith.addf %14, %25 : vector<2x3x256xf32>
    %c15_i32 = arith.constant 15 : i32
    %27 = tpu.dynamic_rotate %1 by %c15_i32 dim 2 : vector<2x2x256xf32>, i32 -> vector<2x2x256xf32>
    %c2 = arith.constant 2 : index
    %c0_18 = arith.constant 0 : index
    %c0_19 = arith.constant 0 : index
    %28 = vector.load %arg3[%c2, %c0_18, %c0_19] : memref<9x1x256xf32, #tpu.memory_space<vmem>>, vector<1x1x256xf32>
    %29 = vector.shape_cast %28 : vector<1x1x256xf32> to vector<1x256xf32>
    %30 = vector.shape_cast %29 : vector<1x256xf32> to vector<1x1x256xf32>
    %31 = vector.broadcast %30 : vector<1x1x256xf32> to vector<2x2x256xf32>
    %32 = arith.mulf %27, %31 : vector<2x2x256xf32>
    %c0_20 = arith.constant 0 : index
    %c2_21 = arith.constant 2 : index
    %c0_22 = arith.constant 0 : index
    %c0_23 = arith.constant 0 : index
    %33 = vector.load %arg2[%c0_20, %c2_21, %c0_22, %c0_23] : memref<1x9x3x2xf32, #tpu.memory_space<vmem>>, vector<1x1x3x2xf32>
    %34 = vector.shape_cast %33 : vector<1x1x3x2xf32> to vector<3x2xf32>
    %35 = vector.shape_cast %34 : vector<3x2xf32> to vector<1x3x2xf32>
    %36 = vector.broadcast %35 : vector<1x3x2xf32> to vector<2x3x2xf32>
    "tpu.trace_start"() <{level = 10 : i32, message = "noc,ncl->nol"}> : () -> ()
    %cst_24 = arith.constant dense<0.000000e+00> : vector<2x3x256xf32>
    %37 = tpu.matmul %36, %32, %cst_24 {dimension_numbers = #tpu.dot_dimension_numbers<[2], [1], [1], [2], [0, 0, 0, 1, 1, 2], [0], [0]>} : vector<2x3x2xf32>, vector<2x2x256xf32>, vector<2x3x256xf32> -> vector<2x3x256xf32>
    "tpu.trace_stop"() : () -> ()
    %38 = arith.addf %26, %37 : vector<2x3x256xf32>
    %c1_i32 = arith.constant 1 : i32
    %39 = tpu.dynamic_rotate %1 by %c1_i32 dim 2 : vector<2x2x256xf32>, i32 -> vector<2x2x256xf32>
    %c3 = arith.constant 3 : index
    %c0_25 = arith.constant 0 : index
    %c0_26 = arith.constant 0 : index
    %40 = vector.load %arg3[%c3, %c0_25, %c0_26] : memref<9x1x256xf32, #tpu.memory_space<vmem>>, vector<1x1x256xf32>
    %41 = vector.shape_cast %40 : vector<1x1x256xf32> to vector<1x256xf32>
    %42 = vector.shape_cast %41 : vector<1x256xf32> to vector<1x1x256xf32>
    %43 = vector.broadcast %42 : vector<1x1x256xf32> to vector<2x2x256xf32>
    %44 = arith.mulf %39, %43 : vector<2x2x256xf32>
    %c0_27 = arith.constant 0 : index
    %c3_28 = arith.constant 3 : index
    %c0_29 = arith.constant 0 : index
    %c0_30 = arith.constant 0 : index
    %45 = vector.load %arg2[%c0_27, %c3_28, %c0_29, %c0_30] : memref<1x9x3x2xf32, #tpu.memory_space<vmem>>, vector<1x1x3x2xf32>
    %46 = vector.shape_cast %45 : vector<1x1x3x2xf32> to vector<3x2xf32>
    %47 = vector.shape_cast %46 : vector<3x2xf32> to vector<1x3x2xf32>
    %48 = vector.broadcast %47 : vector<1x3x2xf32> to vector<2x3x2xf32>
    "tpu.trace_start"() <{level = 10 : i32, message = "noc,ncl->nol"}> : () -> ()
    %cst_31 = arith.constant dense<0.000000e+00> : vector<2x3x256xf32>
    %49 = tpu.matmul %48, %44, %cst_31 {dimension_numbers = #tpu.dot_dimension_numbers<[2], [1], [1], [2], [0, 0, 0, 1, 1, 2], [0], [0]>} : vector<2x3x2xf32>, vector<2x2x256xf32>, vector<2x3x256xf32> -> vector<2x3x256xf32>
    "tpu.trace_stop"() : () -> ()
    %50 = arith.addf %38, %49 : vector<2x3x256xf32>
    %c0_32 = arith.constant 0 : index
    %c4 = arith.constant 4 : index
    %c0_33 = arith.constant 0 : index
    %c0_34 = arith.constant 0 : index
    %51 = vector.load %arg2[%c0_32, %c4, %c0_33, %c0_34] : memref<1x9x3x2xf32, #tpu.memory_space<vmem>>, vector<1x1x3x2xf32>
    %52 = vector.shape_cast %51 : vector<1x1x3x2xf32> to vector<3x2xf32>
    %53 = vector.shape_cast %52 : vector<3x2xf32> to vector<1x3x2xf32>
    %54 = vector.broadcast %53 : vector<1x3x2xf32> to vector<2x3x2xf32>
    "tpu.trace_start"() <{level = 10 : i32, message = "noc,ncl->nol"}> : () -> ()
    %cst_35 = arith.constant dense<0.000000e+00> : vector<2x3x256xf32>
    %55 = tpu.matmul %54, %1, %cst_35 {dimension_numbers = #tpu.dot_dimension_numbers<[2], [1], [1], [2], [0, 0, 0, 1, 1, 2], [0], [0]>} : vector<2x3x2xf32>, vector<2x2x256xf32>, vector<2x3x256xf32> -> vector<2x3x256xf32>
    "tpu.trace_stop"() : () -> ()
    %56 = arith.addf %50, %55 : vector<2x3x256xf32>
    %c255_i32 = arith.constant 255 : i32
    %57 = tpu.dynamic_rotate %1 by %c255_i32 dim 2 : vector<2x2x256xf32>, i32 -> vector<2x2x256xf32>
    %c5 = arith.constant 5 : index
    %c0_36 = arith.constant 0 : index
    %c0_37 = arith.constant 0 : index
    %58 = vector.load %arg3[%c5, %c0_36, %c0_37] : memref<9x1x256xf32, #tpu.memory_space<vmem>>, vector<1x1x256xf32>
    %59 = vector.shape_cast %58 : vector<1x1x256xf32> to vector<1x256xf32>
    %60 = vector.shape_cast %59 : vector<1x256xf32> to vector<1x1x256xf32>
    %61 = vector.broadcast %60 : vector<1x1x256xf32> to vector<2x2x256xf32>
    %62 = arith.mulf %57, %61 : vector<2x2x256xf32>
    %c0_38 = arith.constant 0 : index
    %c5_39 = arith.constant 5 : index
    %c0_40 = arith.constant 0 : index
    %c0_41 = arith.constant 0 : index
    %63 = vector.load %arg2[%c0_38, %c5_39, %c0_40, %c0_41] : memref<1x9x3x2xf32, #tpu.memory_space<vmem>>, vector<1x1x3x2xf32>
    %64 = vector.shape_cast %63 : vector<1x1x3x2xf32> to vector<3x2xf32>
    %65 = vector.shape_cast %64 : vector<3x2xf32> to vector<1x3x2xf32>
    %66 = vector.broadcast %65 : vector<1x3x2xf32> to vector<2x3x2xf32>
    "tpu.trace_start"() <{level = 10 : i32, message = "noc,ncl->nol"}> : () -> ()
    %cst_42 = arith.constant dense<0.000000e+00> : vector<2x3x256xf32>
    %67 = tpu.matmul %66, %62, %cst_42 {dimension_numbers = #tpu.dot_dimension_numbers<[2], [1], [1], [2], [0, 0, 0, 1, 1, 2], [0], [0]>} : vector<2x3x2xf32>, vector<2x2x256xf32>, vector<2x3x256xf32> -> vector<2x3x256xf32>
    "tpu.trace_stop"() : () -> ()
    %68 = arith.addf %56, %67 : vector<2x3x256xf32>
    %c241_i32 = arith.constant 241 : i32
    %69 = tpu.dynamic_rotate %1 by %c241_i32 dim 2 : vector<2x2x256xf32>, i32 -> vector<2x2x256xf32>
    %c6 = arith.constant 6 : index
    %c0_43 = arith.constant 0 : index
    %c0_44 = arith.constant 0 : index
    %70 = vector.load %arg3[%c6, %c0_43, %c0_44] : memref<9x1x256xf32, #tpu.memory_space<vmem>>, vector<1x1x256xf32>
    %71 = vector.shape_cast %70 : vector<1x1x256xf32> to vector<1x256xf32>
    %72 = vector.shape_cast %71 : vector<1x256xf32> to vector<1x1x256xf32>
    %73 = vector.broadcast %72 : vector<1x1x256xf32> to vector<2x2x256xf32>
    %74 = arith.mulf %69, %73 : vector<2x2x256xf32>
    %c0_45 = arith.constant 0 : index
    %c6_46 = arith.constant 6 : index
    %c0_47 = arith.constant 0 : index
    %c0_48 = arith.constant 0 : index
    %75 = vector.load %arg2[%c0_45, %c6_46, %c0_47, %c0_48] : memref<1x9x3x2xf32, #tpu.memory_space<vmem>>, vector<1x1x3x2xf32>
    %76 = vector.shape_cast %75 : vector<1x1x3x2xf32> to vector<3x2xf32>
    %77 = vector.shape_cast %76 : vector<3x2xf32> to vector<1x3x2xf32>
    %78 = vector.broadcast %77 : vector<1x3x2xf32> to vector<2x3x2xf32>
    "tpu.trace_start"() <{level = 10 : i32, message = "noc,ncl->nol"}> : () -> ()
    %cst_49 = arith.constant dense<0.000000e+00> : vector<2x3x256xf32>
    %79 = tpu.matmul %78, %74, %cst_49 {dimension_numbers = #tpu.dot_dimension_numbers<[2], [1], [1], [2], [0, 0, 0, 1, 1, 2], [0], [0]>} : vector<2x3x2xf32>, vector<2x2x256xf32>, vector<2x3x256xf32> -> vector<2x3x256xf32>
    "tpu.trace_stop"() : () -> ()
    %80 = arith.addf %68, %79 : vector<2x3x256xf32>
    %c240_i32 = arith.constant 240 : i32
    %81 = tpu.dynamic_rotate %1 by %c240_i32 dim 2 : vector<2x2x256xf32>, i32 -> vector<2x2x256xf32>
    %c7 = arith.constant 7 : index
    %c0_50 = arith.constant 0 : index
    %c0_51 = arith.constant 0 : index
    %82 = vector.load %arg3[%c7, %c0_50, %c0_51] : memref<9x1x256xf32, #tpu.memory_space<vmem>>, vector<1x1x256xf32>
    %83 = vector.shape_cast %82 : vector<1x1x256xf32> to vector<1x256xf32>
    %84 = vector.shape_cast %83 : vector<1x256xf32> to vector<1x1x256xf32>
    %85 = vector.broadcast %84 : vector<1x1x256xf32> to vector<2x2x256xf32>
    %86 = arith.mulf %81, %85 : vector<2x2x256xf32>
    %c0_52 = arith.constant 0 : index
    %c7_53 = arith.constant 7 : index
    %c0_54 = arith.constant 0 : index
    %c0_55 = arith.constant 0 : index
    %87 = vector.load %arg2[%c0_52, %c7_53, %c0_54, %c0_55] : memref<1x9x3x2xf32, #tpu.memory_space<vmem>>, vector<1x1x3x2xf32>
    %88 = vector.shape_cast %87 : vector<1x1x3x2xf32> to vector<3x2xf32>
    %89 = vector.shape_cast %88 : vector<3x2xf32> to vector<1x3x2xf32>
    %90 = vector.broadcast %89 : vector<1x3x2xf32> to vector<2x3x2xf32>
    "tpu.trace_start"() <{level = 10 : i32, message = "noc,ncl->nol"}> : () -> ()
    %cst_56 = arith.constant dense<0.000000e+00> : vector<2x3x256xf32>
    %91 = tpu.matmul %90, %86, %cst_56 {dimension_numbers = #tpu.dot_dimension_numbers<[2], [1], [1], [2], [0, 0, 0, 1, 1, 2], [0], [0]>} : vector<2x3x2xf32>, vector<2x2x256xf32>, vector<2x3x256xf32> -> vector<2x3x256xf32>
    "tpu.trace_stop"() : () -> ()
    %92 = arith.addf %80, %91 : vector<2x3x256xf32>
    %c239_i32 = arith.constant 239 : i32
    %93 = tpu.dynamic_rotate %1 by %c239_i32 dim 2 : vector<2x2x256xf32>, i32 -> vector<2x2x256xf32>
    %c8 = arith.constant 8 : index
    %c0_57 = arith.constant 0 : index
    %c0_58 = arith.constant 0 : index
    %94 = vector.load %arg3[%c8, %c0_57, %c0_58] : memref<9x1x256xf32, #tpu.memory_space<vmem>>, vector<1x1x256xf32>
    %95 = vector.shape_cast %94 : vector<1x1x256xf32> to vector<1x256xf32>
    %96 = vector.shape_cast %95 : vector<1x256xf32> to vector<1x1x256xf32>
    %97 = vector.broadcast %96 : vector<1x1x256xf32> to vector<2x2x256xf32>
    %98 = arith.mulf %93, %97 : vector<2x2x256xf32>
    %c0_59 = arith.constant 0 : index
    %c8_60 = arith.constant 8 : index
    %c0_61 = arith.constant 0 : index
    %c0_62 = arith.constant 0 : index
    %99 = vector.load %arg2[%c0_59, %c8_60, %c0_61, %c0_62] : memref<1x9x3x2xf32, #tpu.memory_space<vmem>>, vector<1x1x3x2xf32>
    %100 = vector.shape_cast %99 : vector<1x1x3x2xf32> to vector<3x2xf32>
    %101 = vector.shape_cast %100 : vector<3x2xf32> to vector<1x3x2xf32>
    %102 = vector.broadcast %101 : vector<1x3x2xf32> to vector<2x3x2xf32>
    "tpu.trace_start"() <{level = 10 : i32, message = "noc,ncl->nol"}> : () -> ()
    %cst_63 = arith.constant dense<0.000000e+00> : vector<2x3x256xf32>
    %103 = tpu.matmul %102, %98, %cst_63 {dimension_numbers = #tpu.dot_dimension_numbers<[2], [1], [1], [2], [0, 0, 0, 1, 1, 2], [0], [0]>} : vector<2x3x2xf32>, vector<2x2x256xf32>, vector<2x3x256xf32> -> vector<2x3x256xf32>
    "tpu.trace_stop"() : () -> ()
    %104 = arith.addf %92, %103 : vector<2x3x256xf32>
    %c0_64 = arith.constant 0 : index
    %c0_65 = arith.constant 0 : index
    %c0_66 = arith.constant 0 : index
    %105 = vector.load %arg4[%c0_64, %c0_65, %c0_66] : memref<1x3x1xf32, #tpu.memory_space<vmem>>, vector<1x3x1xf32>
    %106 = vector.shape_cast %105 : vector<1x3x1xf32> to vector<3x1xf32>
    %107 = vector.shape_cast %106 : vector<3x1xf32> to vector<1x3x1xf32>
    %108 = vector.broadcast %107 : vector<1x3x1xf32> to vector<2x3x256xf32>
    %109 = arith.addf %104, %108 : vector<2x3x256xf32>
    %c0_67 = arith.constant 0 : index
    %c0_68 = arith.constant 0 : index
    %c0_69 = arith.constant 0 : index
    %c0_70 = arith.constant 0 : index
    %110 = vector.load %arg5[%c0_67, %c0_68, %c0_69, %c0_70] : memref<2x1x3x256xf32, #tpu.memory_space<vmem>>, vector<2x1x3x256xf32>
    %111 = vector.shape_cast %110 : vector<2x1x3x256xf32> to vector<2x3x256xf32>
    %112 = vector.shape_cast %109 : vector<2x3x256xf32> to vector<2x1x3x256xf32>
    tpu.vector_store %arg5[%c0_67, %c0_68, %c0_69, %c0_70], %112 {strides = array<i32>} : memref<2x1x3x256xf32, #tpu.memory_space<vmem>>, vector<2x1x3x256xf32>,
    return
  }
  func.func @transform_0(%arg0: i32) -> (i32, i32, i32, i32) {
    %c0_i32 = arith.constant 0 : i32
    %c0_i32_0 = arith.constant 0 : i32
    %c0_i32_1 = arith.constant 0 : i32
    %c0_i32_2 = arith.constant 0 : i32
    return %c0_i32, %arg0, %c0_i32_0, %c0_i32_1 : i32, i32, i32, i32
  }
  func.func @transform_1(%arg0: i32) -> (i32, i32, i32, i32) {
    %c0_i32 = arith.constant 0 : i32
    %c0_i32_0 = arith.constant 0 : i32
    %c0_i32_1 = arith.constant 0 : i32
    %c0_i32_2 = arith.constant 0 : i32
    return %arg0, %c0_i32, %c0_i32_0, %c0_i32_1 : i32, i32, i32, i32
  }
  func.func @transform_2(%arg0: i32) -> (i32, i32, i32) {
    %c0_i32 = arith.constant 0 : i32
    %c0_i32_0 = arith.constant 0 : i32
    %c0_i32_1 = arith.constant 0 : i32
    %c0_i32_2 = arith.constant 0 : i32
    return %c0_i32, %c0_i32_0, %c0_i32_1 : i32, i32, i32
  }
  func.func @transform_3(%arg0: i32) -> (i32, i32, i32) {
    %c0_i32 = arith.constant 0 : i32
    %c0_i32_0 = arith.constant 0 : i32
    %c0_i32_1 = arith.constant 0 : i32
    return %arg0, %c0_i32, %c0_i32_0 : i32, i32, i32
  }
  func.func @transform_4(%arg0: i32) -> (i32, i32, i32, i32) {
    %c0_i32 = arith.constant 0 : i32
    %c0_i32_0 = arith.constant 0 : i32
    %c0_i32_1 = arith.constant 0 : i32
    %c0_i32_2 = arith.constant 0 : i32
    return %c0_i32, %arg0, %c0_i32_0, %c0_i32_1 : i32, i32, i32, i32
  }
}

</mosaic_0001>

<llo_original>
// kernel: tpu_custom_call.1
$region0: #{tpu_custom_call.1}
  #allocation0 [shape = 'u32[]', space=smem, size = 0x4, offset = 0x4, fixed_abs, tag = 'smem constant byte address 0x4 - core index']
  #allocation1 [shape = 'u32[144,128]{1,0:T(1,128)}', space=vmem, size = 0x12000, scoped, tag = 'internal scratch']
  %s0 = inlined_call_operand.vmem [shape: f32[2,2,2,256], index: 0, kind: input, shape index: {}]
  %s1 = inlined_call_operand.vmem [shape: f32[2,9,3,2], index: 1, kind: input, shape index: {}]
  %s2 = inlined_call_operand.vmem [shape: f32[9,1,256], index: 2, kind: input, shape index: {}]
  %s3 = inlined_call_operand.vmem [shape: f32[2,3,1], index: 3, kind: input, shape index: {}]
  %s4 = inlined_call_operand.vmem [shape: f32[2,2,3,256], index: 4, kind: output, shape index: {}]
  %s5 = sld [smem:[#allocation0]]
  $region124: #{tpu_custom_call.1} parent=0
    _
  %s7 = ssub.s32 1, %s5
  %s8 = scalar_select 0, %s7, %s5
  $region1: #{tpu_custom_call.1} parent=0
    #allocation2 [shape = 'u8[8192]{0}', space=vmem, size = 0x2000, scoped, tag = 'input window, operand 0']
    #allocation3 [shape = 'u8[16384]{0}', space=vmem, size = 0x4000, scoped, tag = 'output window, operand 0']
    loop: start=0, step=1, limit=4
    $region2: #{tpu_custom_call.1} parent=1 // loop_pre_header
      _
    $region3: #{tpu_custom_call.1} parent=1 // loop_header
      %s10 = sphi 0, %s14
      %p11 = scmp.ge.s32.totalorder %s10, 4
      %s20 = sphi 0, %s22
      %s23 = sphi 0, %s20
      %s24 = sphi 0, %s23
      %s40 = sphi 0, %s24
      %s46 = sphi 0, %s48
      %s49 = sphi 0, %s46
      %s50 = sphi 0, %s49
      %s66 = sphi 0, %s50
      %s70 = sphi 0, %s70
      %s72 = sphi 0, %s70
      %s73 = sphi 0, %s72
      %s87 = sphi 0, %s73
      %s93 = sphi 0, %s95
      %s96 = sphi 0, %s93
      %s97 = sphi 0, %s96
      %s113 = sphi 0, %s97
      %s119 = sphi 0, %s121
      %s122 = sphi 0, %s119
      %s123 = sphi 0, %s122
      %s139 = sphi 0, %s123
    $region4: #{tpu_custom_call.1} parent=1 // loop_header_branch
      %13 = sbr.rel (%p11) target = $region8
    $region5: #{tpu_custom_call.1} parent=1 // loop_body
      %s15 = ssub.s32 %s10, 1
      %s16 = ssub.s32 %s10, 2
      %s17 = sadd.s32 %s10, 1
      %s18 = ssub.s32 %s10, %s17
      %p19 = scmp.eq.s32.totalorder %s18, 0
      %s21 = sadd.s32 %s20, 1
      %s22 = scalar_select %p19, %s20, %s21
      %p25 = pneg %p19
      %p26 = scmp.eq.s32.totalorder %s10, 1
      %p27 = por %p25, %p26
      %p28 = scmp.ne.s32.totalorder %s20, %s23
      %p29 = scmp.eq.s32.totalorder %s10, 0
      %p30 = por %p28, %p29
      %p31 = scmp.ne.s32.totalorder %s20, %s23
      %p32 = scmp.eq.s32.totalorder %s15, 1
      %p33 = por %p31, %p32
      %p34 = scmp.ne.s32.totalorder %s23, %s24
      %p35 = scmp.eq.s32.totalorder %s15, 0
      %p36 = por %p34, %p35
      %p37 = scmp.ne.s32.totalorder %s23, %s24
      %p38 = scmp.eq.s32.totalorder %s16, 1
      %p39 = por %p37, %p38
      %p41 = scmp.ne.s32.totalorder %s24, %s40
      %p42 = scmp.eq.s32.totalorder %s16, 0
      %p43 = por %p41, %p42
      %s44 = ssub.s32 %s10, %s17
      %p45 = scmp.eq.s32.totalorder %s44, 0
      %s47 = sadd.s32 %s46, 1
      %s48 = scalar_select %p45, %s46, %s47
      %p51 = pneg %p45
      %p52 = scmp.eq.s32.totalorder %s10, 1
      %p53 = por %p51, %p52
      %p54 = scmp.ne.s32.totalorder %s46, %s49
      %p55 = scmp.eq.s32.totalorder %s10, 0
      %p56 = por %p54, %p55
      %p57 = scmp.ne.s32.totalorder %s46, %s49
      %p58 = scmp.eq.s32.totalorder %s15, 1
      %p59 = por %p57, %p58
      %p60 = scmp.ne.s32.totalorder %s49, %s50
      %p61 = scmp.eq.s32.totalorder %s15, 0
      %p62 = por %p60, %p61
      %p63 = scmp.ne.s32.totalorder %s49, %s50
      %p64 = scmp.eq.s32.totalorder %s16, 1
      %p65 = por %p63, %p64
      %p67 = scmp.ne.s32.totalorder %s50, %s66
      %p68 = scmp.eq.s32.totalorder %s16, 0
      %p69 = por %p67, %p68
      %s71 = sadd.s32 %s70, 1
      %p74 = scmp.eq.s32.totalorder %s10, 1
      %p75 = scmp.ne.s32.totalorder %s70, %s72
      %p76 = scmp.eq.s32.totalorder %s10, 0
      %p77 = por %p75, %p76
      %p78 = scmp.ne.s32.totalorder %s70, %s72
      %p79 = scmp.eq.s32.totalorder %s15, 1
      %p80 = por %p78, %p79
      %p81 = scmp.ne.s32.totalorder %s72, %s73
      %p82 = scmp.eq.s32.totalorder %s15, 0
      %p83 = por %p81, %p82
      %p84 = scmp.ne.s32.totalorder %s72, %s73
      %p85 = scmp.eq.s32.totalorder %s16, 1
      %p86 = por %p84, %p85
      %p88 = scmp.ne.s32.totalorder %s73, %s87
      %p89 = scmp.eq.s32.totalorder %s16, 0
      %p90 = por %p88, %p89
      %s91 = ssub.s32 %s10, %s17
      %p92 = scmp.eq.s32.totalorder %s91, 0
      %s94 = sadd.s32 %s93, 1
      %s95 = scalar_select %p92, %s93, %s94
      %p98 = pneg %p92
      %p99 = scmp.eq.s32.totalorder %s10, 1
      %p100 = por %p98, %p99
      %p101 = scmp.ne.s32.totalorder %s93, %s96
      %p102 = scmp.eq.s32.totalorder %s10, 0
      %p103 = por %p101, %p102
      %p104 = scmp.ne.s32.totalorder %s93, %s96
      %p105 = scmp.eq.s32.totalorder %s15, 1
      %p106 = por %p104, %p105
      %p107 = scmp.ne.s32.totalorder %s96, %s97
      %p108 = scmp.eq.s32.totalorder %s15, 0
      %p109 = por %p107, %p108
      %p110 = scmp.ne.s32.totalorder %s96, %s97
      %p111 = scmp.eq.s32.totalorder %s16, 1
      %p112 = por %p110, %p111
      %p114 = scmp.ne.s32.totalorder %s97, %s113
      %p115 = scmp.eq.s32.totalorder %s16, 0
      %p116 = por %p114, %p115
      %s117 = ssub.s32 %s10, %s17
      %p118 = scmp.eq.s32.totalorder %s117, 0
      %s120 = sadd.s32 %s119, 1
      %s121 = scalar_select %p118, %s119, %s120
      %p124 = pneg %p118
      %p125 = scmp.eq.s32.totalorder %s10, 1
      %p126 = por %p124, %p125
      %p127 = scmp.ne.s32.totalorder %s119, %s122
      %p128 = scmp.eq.s32.totalorder %s10, 0
      %p129 = por %p127, %p128
      %p130 = scmp.ne.s32.totalorder %s119, %s122
      %p131 = scmp.eq.s32.totalorder %s15, 1
      %p132 = por %p130, %p131
      %p133 = scmp.ne.s32.totalorder %s122, %s123
      %p134 = scmp.eq.s32.totalorder %s15, 0
      %p135 = por %p133, %p134
      %p136 = scmp.ne.s32.totalorder %s122, %s123
      %p137 = scmp.eq.s32.totalorder %s16, 1
      %p138 = por %p136, %p137
      %p140 = scmp.ne.s32.totalorder %s123, %s139
      %p141 = scmp.eq.s32.totalorder %s16, 0
      %p142 = por %p140, %p141
      %p143 = scmp.le.s32.totalorder 1, %s10
      %p144 = scmp.lt.s32.totalorder %s10, 3
      %p145 = pnand %p143, %p144
      %p146 = pneg %p145
      // Predicated region
      $region9: #{tpu_custom_call.1} parent=5 // pred_check
        _
      $region10: #{tpu_custom_call.1} parent=5 // pred_check_branch
        %148 = sbr.rel (%p145) target = $region12
      $region11: #{tpu_custom_call.1} parent=5 // pred_region
        %s149 = ssub.s32 %s10, 1
        // Predicated region
        $region13: #{tpu_custom_call.1} parent=11 // pred_check
          %p150 = pneg %p83
        $region14: #{tpu_custom_call.1} parent=11 // pred_check_branch
          %152 = sbr.rel (%p150) target = $region16
        $region15: #{tpu_custom_call.1} parent=11 // pred_region
          _
        $region16: #{tpu_custom_call.1} parent=11 // pred_fallthru
          _
      $region12: #{tpu_custom_call.1} parent=5 // pred_fallthru
        _
      %p153 = scmp.lt.s32.totalorder %s10, 2
      // Predicated region
      $region17: #{tpu_custom_call.1} parent=5 // pred_check
        %p154 = pneg %p153
      $region18: #{tpu_custom_call.1} parent=5 // pred_check_branch
        %156 = sbr.rel (%p154) target = $region20
      $region19: #{tpu_custom_call.1} parent=5 // pred_region
        // Predicated region
        $region21: #{tpu_custom_call.1} parent=19 // pred_check
          %p157 = pneg %p30
        $region22: #{tpu_custom_call.1} parent=19 // pred_check_branch
          %159 = sbr.rel (%p157) target = $region24
        $region23: #{tpu_custom_call.1} parent=19 // pred_region
          %s160 = sand.u32 %s20, 1
          %s161 = sand.u32 %s20, 1
          %s162 = smul.addr %s161, 8
          %s163 = scalar_lea.vmem [#allocation2], %s162
          %s164 = smul.addr %s10, 2
          %s165 = smul.addr %s164, 2
          %s166 = scalar_lea.vmem %s0, %s165
          // Predicated region
          $region25: #{tpu_custom_call.1} parent=23 // pred_check
            _
          $region26: #{tpu_custom_call.1} parent=23 // pred_check_branch
            %168 = sbr.rel (0) target = $region28
          $region27: #{tpu_custom_call.1} parent=23 // pred_region
            // Predicated region
            $region29: #{tpu_custom_call.1} parent=27 // pred_check
              _
            $region30: #{tpu_custom_call.1} parent=27 // pred_check_branch
              %170 = sbr.rel target = $region32
            $region31: #{tpu_custom_call.1} parent=27 // pred_region
              // Predicated region
              $region44: #{tpu_custom_call.1} parent=31 // pred_check
                _
              $region45: #{tpu_custom_call.1} parent=31 // pred_check_branch
                %188 = sbr.rel (0) target = $region47
              $region46: #{tpu_custom_call.1} parent=31 // pred_region
                loop: start=0, step=1, limit=1
                $region48: #{tpu_custom_call.1} parent=46 // loop_pre_header
                  _
                $region49: #{tpu_custom_call.1} parent=46 // loop_header
                  %s190 = sphi 0, %s194
                  %p191 = scmp.ge.s32.totalorder %s190, 1
                  %s195 = sphi %s166, %s166
                  %s196 = sphi %s163, %s163
                $region50: #{tpu_custom_call.1} parent=46 // loop_header_branch
                  %193 = sbr.rel (%p191) target = $region54
                $region51: #{tpu_custom_call.1} parent=46 // loop_body
                  _
                $region52: #{tpu_custom_call.1} parent=46 // loop_footer
                  %s194 = sadd.s32 1, %s190
                $region53: #{tpu_custom_call.1} parent=46 // loop_footer_branch
                  %189 = sbr.rel target = $region49
                $region54: #{tpu_custom_call.1} parent=46 // loop_exit
                  _
                %s198 = ssub.s32 16, 1
                loop: start=0, step=1, limit=1
                $region55: #{tpu_custom_call.1} parent=46 // loop_pre_header
                  _
                $region56: #{tpu_custom_call.1} parent=46 // loop_header
                  %s200 = sphi 0, %s204
                  %p201 = scmp.ge.s32.totalorder %s200, 1
                  %s205 = sphi %s166, %s166
                  %s206 = sphi %s163, %s163
                $region57: #{tpu_custom_call.1} parent=46 // loop_header_branch
                  %203 = sbr.rel (%p201) target = $region61
                $region58: #{tpu_custom_call.1} parent=46 // loop_body
                  %v207 = vld [vmem:[%s205] sm:%s198]
                  %208 = vst [vmem:[%s206] sm:%s198] %v207
                  %v209 = vld [vmem:[%s205 + $0x8] sm:%s198]
                  %210 = vst [vmem:[%s206 + $0x4] sm:%s198] %v209
                $region59: #{tpu_custom_call.1} parent=46 // loop_footer
                  %s204 = sadd.s32 1, %s200
                $region60: #{tpu_custom_call.1} parent=46 // loop_footer_branch
                  %199 = sbr.rel target = $region56
                $region61: #{tpu_custom_call.1} parent=46 // loop_exit
                  _
              $region47: #{tpu_custom_call.1} parent=31 // pred_fallthru
                _
            $region32: #{tpu_custom_call.1} parent=27 // pred_fallthru
              _
            // Predicated region
            $region33: #{tpu_custom_call.1} parent=27 // pred_check
              _
            $region34: #{tpu_custom_call.1} parent=27 // pred_check_branch
              %172 = sbr.rel (0) target = $region36
            $region35: #{tpu_custom_call.1} parent=27 // pred_region
              %s174 = ssub.s32 16, 1
              loop: start=0, step=1, limit=1
              $region37: #{tpu_custom_call.1} parent=35 // loop_pre_header
                _
              $region38: #{tpu_custom_call.1} parent=35 // loop_header
                %s176 = sphi 0, %s180
                %p177 = scmp.ge.s32.totalorder %s176, 1
                %s181 = sphi %s166, %s166
                %s182 = sphi %s163, %s163
              $region39: #{tpu_custom_call.1} parent=35 // loop_header_branch
                %179 = sbr.rel (%p177) target = $region43
              $region40: #{tpu_custom_call.1} parent=35 // loop_body
                %v183 = vld [vmem:[%s181] sm:%s174]
                %184 = vst [vmem:[%s182] sm:%s174] %v183
                %v185 = vld [vmem:[%s181 + $0x8] sm:%s174]
                %186 = vst [vmem:[%s182 + $0x4] sm:%s174] %v185
              $region41: #{tpu_custom_call.1} parent=35 // loop_footer
                %s180 = sadd.s32 1, %s176
              $region42: #{tpu_custom_call.1} parent=35 // loop_footer_branch
                %175 = sbr.rel target = $region38
              $region43: #{tpu_custom_call.1} parent=35 // loop_exit
                _
            $region36: #{tpu_custom_call.1} parent=27 // pred_fallthru
              _
          $region28: #{tpu_custom_call.1} parent=23 // pred_fallthru
            _
          %211 = vnop
        $region24: #{tpu_custom_call.1} parent=19 // pred_fallthru
          _
        // Predicated region
        $region62: #{tpu_custom_call.1} parent=19 // pred_check
          %p212 = pneg %p56
        $region63: #{tpu_custom_call.1} parent=19 // pred_check_branch
          %214 = sbr.rel (%p212) target = $region65
        $region64: #{tpu_custom_call.1} parent=19 // pred_region
          %p215 = scmp.lt.s32.totalorder %s10, 1
          %s216 = scalar_select %p215, %s10, 1
          %s217 = smul.addr %s216, 9
          %s218 = smul.addr %s217, 4
          %s219 = scalar_lea.vmem %s1, %s218
        $region65: #{tpu_custom_call.1} parent=19 // pred_fallthru
          _
        // Predicated region
        $region66: #{tpu_custom_call.1} parent=19 // pred_check
          %p220 = pneg %p103
        $region67: #{tpu_custom_call.1} parent=19 // pred_check_branch
          %222 = sbr.rel (%p220) target = $region69
        $region68: #{tpu_custom_call.1} parent=19 // pred_region
          %p223 = scmp.lt.s32.totalorder %s10, 1
          %s224 = scalar_select %p223, %s10, 1
          %s225 = smul.addr %s224, 4
          %s226 = scalar_lea.vmem %s3, %s225
        $region69: #{tpu_custom_call.1} parent=19 // pred_fallthru
          _
      $region20: #{tpu_custom_call.1} parent=5 // pred_fallthru
        _
      %p227 = scmp.le.s32.totalorder 1, %s10
      %p228 = scmp.lt.s32.totalorder %s10, 3
      %p229 = pnand %p227, %p228
      %p230 = pneg %p229
      // Predicated region
      $region70: #{tpu_custom_call.1} parent=5 // pred_check
        _
      $region71: #{tpu_custom_call.1} parent=5 // pred_check_branch
        %232 = sbr.rel (%p229) target = $region73
      $region72: #{tpu_custom_call.1} parent=5 // pred_region
        %s233 = ssub.s32 %s10, 1
        %s234 = sand.u32 %s23, 1
        %s235 = sand.u32 %s23, 1
        %s236 = smul.addr %s235, 8
        %s237 = scalar_lea.vmem [#allocation2], %s236
        // Predicated region
        $region74: #{tpu_custom_call.1} parent=72 // pred_check
          %p238 = pneg %p36
        $region75: #{tpu_custom_call.1} parent=72 // pred_check_branch
          %240 = sbr.rel (%p238) target = $region77
        $region76: #{tpu_custom_call.1} parent=72 // pred_region
          _
        $region77: #{tpu_custom_call.1} parent=72 // pred_fallthru
          _
        %s241 = sand.u32 %s23, 1
        %s242 = sand.u32 %s23, 1
        %s243 = smul.addr %s242, 8
        %s244 = scalar_lea.vmem [#allocation2], %s243
        %p245 = pneg %p36
        %p246 = pneg %p33
        %p247 = scmp.lt.s32.totalorder %s15, 1
        %s248 = scalar_select %p247, %s15, 1
        %s249 = smul.addr %s248, 9
        %s250 = smul.addr %s249, 4
        %s251 = scalar_lea.vmem %s1, %s250
        %p252 = pneg %p62
        %p253 = pneg %p59
        %p254 = pneg %p83
        %p255 = pneg %p80
        %p256 = scmp.lt.s32.totalorder %s15, 1
        %s257 = scalar_select %p256, %s15, 1
        %s258 = smul.addr %s257, 4
        %s259 = scalar_lea.vmem %s3, %s258
        %p260 = pneg %p109
        %p261 = pneg %p106
        %p262 = pneg %p135
        %p263 = pneg %p132
        %s264 = sand.u32 %s122, 1
        %s265 = sand.u32 %s122, 1
        %s266 = smul.addr %s265, 16
        %s267 = scalar_lea.vmem [#allocation3], %s266
        %p268 = scmp.lt.s32.totalorder %s15, 1
        %s269 = scalar_select %p268, %s15, 1
        %s270 = smul.addr %s269, 9
        %s271 = smul.addr %s270, 4
        %s272 = scalar_lea.vmem %s1, %s271
        %p273 = scmp.lt.s32.totalorder %s15, 1
        %s274 = scalar_select %p273, %s15, 1
        %s275 = smul.addr %s274, 4
        %s276 = scalar_lea.vmem %s3, %s275
        %v277 = vld [vmem:[%s237] sm:$0xf]
        %v278 = vld [vmem:[%s237 + $0x4] sm:$0xf]
        %v282 = vunpack.c.l.s4 1983009808
        %v283 = vunpack.c.0.s8 %v282
        %v284 = vlaneseq
        %v285 = vshrl.u32 %v284, 7
        %v286 = vsub.s32 %v283, %v285
        %v287 = vrot.slane %v277, %v286
        %v288 = vcombine.high %v287, %v287
        %v290 = vunpack.c.l.s4 1983009808
        %v291 = vunpack.c.0.s8 %v290
        %v292 = vlaneseq
        %v293 = vshrl.u32 %v292, 7
        %v294 = vsub.s32 %v291, %v293
        %v295 = vrot.slane %v278, %v294
        %v296 = vcombine.high %v295, %v295
        %301 = vrot.lane.b32.xlu0 %v287, 17
        %v302 = vpop.permute.xlu0 %301
        %303 = vrot.lane.b32.xlu0 %v295, 17
        %v304 = vpop.permute.xlu0 %303
        %305 = vrot.lane.b32.xlu0 %v288, 17
        %v306 = vpop.permute.xlu0 %305
        %307 = vrot.lane.b32.xlu0 %v296, 17
        %v308 = vpop.permute.xlu0 %307
        %v309 = vlaneseq
        %v310 = vand.u32 %v309, 127
        %vm311 = vcmp.lt.s32.totalorder %v310, 17
        %v312 = vsel %vm311, %v302, %v306
        %v313 = vsel %vm311, %v304, %v308
        %v314 = vsel %vm311, %v306, %v302
        %v315 = vsel %vm311, %v308, %v304
        %v316 = vld [vmem:[%s2] sm:$0x3]
        %v318 = vlaneseq
        %v319 = vshrl.u32 %v318, 7
        %v320 = vsub.s32 0, %v319
        %v321 = vrot.slane %v316, %v320
        %v322 = vlaneseq
        %v323 = vshrl.u32 %v322, 7
        %v324 = vsub.s32 1, %v323
        %v325 = vrot.slane %v316, %v324
        %v328 = vmul.f32 %v314, %v321
        %v329 = vmul.f32 %v312, %v325
        %v330 = vmul.f32 %v315, %v321
        %v331 = vmul.f32 %v313, %v325
        %v332 = vld [vmem:[%s272] sm:$0x7]
        %333 = vrot.lane.b32.xlu0 %v287, 16
        %v334 = vpop.permute.xlu0 %333
        %335 = vrot.lane.b32.xlu0 %v295, 16
        %v336 = vpop.permute.xlu0 %335
        %337 = vrot.lane.b32.xlu0 %v288, 16
        %v338 = vpop.permute.xlu0 %337
        %339 = vrot.lane.b32.xlu0 %v296, 16
        %v340 = vpop.permute.xlu0 %339
        %vm341 = vcmp.lt.s32.totalorder %v310, 16
        %v342 = vsel %vm341, %v334, %v338
        %v343 = vsel %vm341, %v336, %v340
        %v344 = vsel %vm341, %v338, %v334
        %v345 = vsel %vm341, %v340, %v336
        %s346 = scalar_lea.vmem %s2, 2
        %v347 = vld [vmem:[%s346] sm:$0x3]
        %v349 = vlaneseq
        %v350 = vshrl.u32 %v349, 7
        %v351 = vsub.s32 0, %v350
        %v352 = vrot.slane %v347, %v351
        %v353 = vlaneseq
        %v354 = vshrl.u32 %v353, 7
        %v355 = vsub.s32 1, %v354
        %v356 = vrot.slane %v347, %v355
        %v359 = vmul.f32 %v344, %v352
        %v360 = vmul.f32 %v342, %v356
        %v361 = vmul.f32 %v345, %v352
        %v362 = vmul.f32 %v343, %v356
        %s363 = scalar_lea.vmem %s272, 4
        %v364 = vld [vmem:[%s363] sm:$0x7]
        %vm365 = vcmask 15360
        %v367 = vsel %vm365, %v364, 0
        %vm369 = vcmask 1041408
        %v371 = vsel %vm369, %v359, 0
        %v374 = vsel %vm369, %v360, 0
        %376 = vmatprep.subr.mxu0 0.0
        %377 = vmatpush1.msra.mxu0 0.0
        %378 = vmatprep.subr.mxu0 0.0
        %379 = vmatpush1.msra.mxu0 0.0
        %380 = vmatprep.subr.mxu0 0.0
        %381 = vmatpush1.msra.mxu0 0.0
        %382 = vmatprep.subr.mxu0 0.0
        %383 = vmatpush1.msra.mxu0 0.0
        %384 = vmatprep.subr.mxu0 0.0
        %385 = vmatpush1.msra.mxu0 0.0
        %386 = vmatprep.subr.mxu0 0.0
        %387 = vmatpush1.msra.mxu0 0.0
        %388 = vmatprep.subr.mxu0 0.0
        %389 = vmatpush1.msra.mxu0 0.0
        %390 = vmatprep.subr.mxu0 0.0
        %391 = vmatpush1.msra.mxu0 0.0
        %392 = vmatprep.subr.mxu0 0.0
        %393 = vmatpush1.msra.mxu0 0.0
        %394 = vmatprep.subr.mxu0 0.0
        %395 = vmatpush1.msra.mxu0 0.0
        %396 = vmatprep.subr.mxu0 0.0
        %397 = vmatpush1.msra.mxu0 0.0
        %398 = vmatprep.subr.mxu0 0.0
        %399 = vmatpush1.msra.mxu0 0.0
        %400 = vmatprep.subr.mxu0 0.0
        %401 = vmatpush1.msra.mxu0 0.0
        %402 = vmatprep.subr.mxu0 0.0
        %403 = vmatpush1.msra.mxu0 0.0
        %404 = vmatprep.subr.mxu0 0.0
        %405 = vmatpush1.msra.mxu0 0.0
        %406 = vmatprep.subr.mxu0 %v374
        %407 = vmatpush1.msra.mxu0 %v371
        %408 = vmatprep.subr.mxu0 0.0
        %409 = vmatpush2.msra.mxu0 0.0
        %410 = vmatprep.subr.mxu0 0.0
        %411 = vmatpush2.msra.mxu0 0.0
        %412 = vmatprep.subr.mxu0 0.0
        %413 = vmatpush2.msra.mxu0 0.0
        %414 = vmatprep.subr.mxu0 0.0
        %415 = vmatpush2.msra.mxu0 0.0
        %416 = vmatprep.subr.mxu0 0.0
        %417 = vmatpush2.msra.mxu0 0.0
        %418 = vmatprep.subr.mxu0 0.0
        %419 = vmatpush2.msra.mxu0 0.0
        %420 = vmatprep.subr.mxu0 0.0
        %421 = vmatpush2.msra.mxu0 0.0
        %422 = vmatprep.subr.mxu0 0.0
        %423 = vmatpush2.msra.mxu0 0.0
        %424 = vmatprep.subr.mxu0 0.0
        %425 = vmatpush2.msra.mxu0 0.0
        %426 = vmatprep.subr.mxu0 0.0
        %427 = vmatpush2.msra.mxu0 0.0
        %428 = vmatprep.subr.mxu0 0.0
        %429 = vmatpush2.msra.mxu0 0.0
        %430 = vmatprep.subr.mxu0 0.0
        %431 = vmatpush2.msra.mxu0 0.0
        %432 = vmatprep.subr.mxu0 0.0
        %433 = vmatpush2.msra.mxu0 0.0
        %434 = vmatprep.subr.mxu0 0.0
        %435 = vmatpush2.msra.mxu0 0.0
        %436 = vmatprep.subr.mxu0 0.0
        %437 = vmatpush2.msra.mxu0 0.0
        %438 = vmatprep.subr.mxu0 0.0
        %439 = vmatpush2.msra.mxu0 0.0
        %440 = vmatprep.mubr.f32.mxu0 0.0
        %441 = vmatmul.mubr.f32.gmra.mxu0 %v367
        %v442 = vpop.f32.mrf.mxu0
        %v443 = vadd.f32 0.0, %v442
        %v444 = vpop.f32.mrf.mxu0
        %v445 = vadd.f32 0.0, %v444
        %446 = vdwg.mxu0
        %v448 = vsel %vm369, %v361, 0
        %v451 = vsel %vm369, %v362, 0
        %453 = vmatprep.subr.mxu0 0.0
        %454 = vmatpush1.msra.mxu0 0.0
        %455 = vmatprep.subr.mxu0 0.0
        %456 = vmatpush1.msra.mxu0 0.0
        %457 = vmatprep.subr.mxu0 0.0
        %458 = vmatpush1.msra.mxu0 0.0
        %459 = vmatprep.subr.mxu0 0.0
        %460 = vmatpush1.msra.mxu0 0.0
        %461 = vmatprep.subr.mxu0 0.0
        %462 = vmatpush1.msra.mxu0 0.0
        %463 = vmatprep.subr.mxu0 0.0
        %464 = vmatpush1.msra.mxu0 0.0
        %465 = vmatprep.subr.mxu0 0.0
        %466 = vmatpush1.msra.mxu0 0.0
        %467 = vmatprep.subr.mxu0 0.0
        %468 = vmatpush1.msra.mxu0 0.0
        %469 = vmatprep.subr.mxu0 0.0
        %470 = vmatpush1.msra.mxu0 0.0
        %471 = vmatprep.subr.mxu0 0.0
        %472 = vmatpush1.msra.mxu0 0.0
        %473 = vmatprep.subr.mxu0 0.0
        %474 = vmatpush1.msra.mxu0 0.0
        %475 = vmatprep.subr.mxu0 0.0
        %476 = vmatpush1.msra.mxu0 0.0
        %477 = vmatprep.subr.mxu0 0.0
        %478 = vmatpush1.msra.mxu0 0.0
        %479 = vmatprep.subr.mxu0 0.0
        %480 = vmatpush1.msra.mxu0 0.0
        %481 = vmatprep.subr.mxu0 0.0
        %482 = vmatpush1.msra.mxu0 0.0
        %483 = vmatprep.subr.mxu0 %v451
        %484 = vmatpush1.msra.mxu0 %v448
        %485 = vmatprep.subr.mxu0 0.0
        %486 = vmatpush2.msra.mxu0 0.0
        %487 = vmatprep.subr.mxu0 0.0
        %488 = vmatpush2.msra.mxu0 0.0
        %489 = vmatprep.subr.mxu0 0.0
        %490 = vmatpush2.msra.mxu0 0.0
        %491 = vmatprep.subr.mxu0 0.0
        %492 = vmatpush2.msra.mxu0 0.0
        %493 = vmatprep.subr.mxu0 0.0
        %494 = vmatpush2.msra.mxu0 0.0
        %495 = vmatprep.subr.mxu0 0.0
        %496 = vmatpush2.msra.mxu0 0.0
        %497 = vmatprep.subr.mxu0 0.0
        %498 = vmatpush2.msra.mxu0 0.0
        %499 = vmatprep.subr.mxu0 0.0
        %500 = vmatpush2.msra.mxu0 0.0
        %501 = vmatprep.subr.mxu0 0.0
        %502 = vmatpush2.msra.mxu0 0.0
        %503 = vmatprep.subr.mxu0 0.0
        %504 = vmatpush2.msra.mxu0 0.0
        %505 = vmatprep.subr.mxu0 0.0
        %506 = vmatpush2.msra.mxu0 0.0
        %507 = vmatprep.subr.mxu0 0.0
        %508 = vmatpush2.msra.mxu0 0.0
        %509 = vmatprep.subr.mxu0 0.0
        %510 = vmatpush2.msra.mxu0 0.0
        %511 = vmatprep.subr.mxu0 0.0
        %512 = vmatpush2.msra.mxu0 0.0
        %513 = vmatprep.subr.mxu0 0.0
        %514 = vmatpush2.msra.mxu0 0.0
        %515 = vmatprep.subr.mxu0 0.0
        %516 = vmatpush2.msra.mxu0 0.0
        %517 = vmatprep.mubr.f32.mxu0 0.0
        %518 = vmatmul.mubr.f32.gmra.mxu0 %v367
        %v519 = vpop.f32.mrf.mxu0
        %v520 = vadd.f32 0.0, %v519
        %v521 = vpop.f32.mrf.mxu0
        %v522 = vadd.f32 0.0, %v521
        %523 = vdwg.mxu0
        %v525 = vsel %vm365, %v332, 0
        %v528 = vsel %vm369, %v328, 0
        %v531 = vsel %vm369, %v329, 0
        %533 = vmatprep.subr.mxu0 0.0
        %534 = vmatpush1.msra.mxu0 0.0
        %535 = vmatprep.subr.mxu0 0.0
        %536 = vmatpush1.msra.mxu0 0.0
        %537 = vmatprep.subr.mxu0 0.0
        %538 = vmatpush1.msra.mxu0 0.0
        %539 = vmatprep.subr.mxu0 0.0
        %540 = vmatpush1.msra.mxu0 0.0
        %541 = vmatprep.subr.mxu0 0.0
        %542 = vmatpush1.msra.mxu0 0.0
        %543 = vmatprep.subr.mxu0 0.0
        %544 = vmatpush1.msra.mxu0 0.0
        %545 = vmatprep.subr.mxu0 0.0
        %546 = vmatpush1.msra.mxu0 0.0
        %547 = vmatprep.subr.mxu0 0.0
        %548 = vmatpush1.msra.mxu0 0.0
        %549 = vmatprep.subr.mxu0 0.0
        %550 = vmatpush1.msra.mxu0 0.0
        %551 = vmatprep.subr.mxu0 0.0
        %552 = vmatpush1.msra.mxu0 0.0
        %553 = vmatprep.subr.mxu0 0.0
        %554 = vmatpush1.msra.mxu0 0.0
        %555 = vmatprep.subr.mxu0 0.0
        %556 = vmatpush1.msra.mxu0 0.0
        %557 = vmatprep.subr.mxu0 0.0
        %558 = vmatpush1.msra.mxu0 0.0
        %559 = vmatprep.subr.mxu0 0.0
        %560 = vmatpush1.msra.mxu0 0.0
        %561 = vmatprep.subr.mxu0 0.0
        %562 = vmatpush1.msra.mxu0 0.0
        %563 = vmatprep.subr.mxu0 %v531
        %564 = vmatpush1.msra.mxu0 %v528
        %565 = vmatprep.subr.mxu0 0.0
        %566 = vmatpush2.msra.mxu0 0.0
        %567 = vmatprep.subr.mxu0 0.0
        %568 = vmatpush2.msra.mxu0 0.0
        %569 = vmatprep.subr.mxu0 0.0
        %570 = vmatpush2.msra.mxu0 0.0
        %571 = vmatprep.subr.mxu0 0.0
        %572 = vmatpush2.msra.mxu0 0.0
        %573 = vmatprep.subr.mxu0 0.0
        %574 = vmatpush2.msra.mxu0 0.0
        %575 = vmatprep.subr.mxu0 0.0
        %576 = vmatpush2.msra.mxu0 0.0
        %577 = vmatprep.subr.mxu0 0.0
        %578 = vmatpush2.msra.mxu0 0.0
        %579 = vmatprep.subr.mxu0 0.0
        %580 = vmatpush2.msra.mxu0 0.0
        %581 = vmatprep.subr.mxu0 0.0
        %582 = vmatpush2.msra.mxu0 0.0
        %583 = vmatprep.subr.mxu0 0.0
        %584 = vmatpush2.msra.mxu0 0.0
        %585 = vmatprep.subr.mxu0 0.0
        %586 = vmatpush2.msra.mxu0 0.0
        %587 = vmatprep.subr.mxu0 0.0
        %588 = vmatpush2.msra.mxu0 0.0
        %589 = vmatprep.subr.mxu0 0.0
        %590 = vmatpush2.msra.mxu0 0.0
        %591 = vmatprep.subr.mxu0 0.0
        %592 = vmatpush2.msra.mxu0 0.0
        %593 = vmatprep.subr.mxu0 0.0
        %594 = vmatpush2.msra.mxu0 0.0
        %595 = vmatprep.subr.mxu0 0.0
        %596 = vmatpush2.msra.mxu0 0.0
        %597 = vmatprep.mubr.f32.mxu0 0.0
        %598 = vmatmul.mubr.f32.gmra.mxu0 %v525
        %v599 = vpop.f32.mrf.mxu0
        %v600 = vadd.f32 %v443, %v599
        %v601 = vpop.f32.mrf.mxu0
        %v602 = vadd.f32 %v445, %v601
        %603 = vdwg.mxu0
        %v605 = vsel %vm369, %v330, 0
        %v608 = vsel %vm369, %v331, 0
        %610 = vmatprep.subr.mxu0 0.0
        %611 = vmatpush1.msra.mxu0 0.0
        %612 = vmatprep.subr.mxu0 0.0
        %613 = vmatpush1.msra.mxu0 0.0
        %614 = vmatprep.subr.mxu0 0.0
        %615 = vmatpush1.msra.mxu0 0.0
        %616 = vmatprep.subr.mxu0 0.0
        %617 = vmatpush1.msra.mxu0 0.0
        %618 = vmatprep.subr.mxu0 0.0
        %619 = vmatpush1.msra.mxu0 0.0
        %620 = vmatprep.subr.mxu0 0.0
        %621 = vmatpush1.msra.mxu0 0.0
        %622 = vmatprep.subr.mxu0 0.0
        %623 = vmatpush1.msra.mxu0 0.0
        %624 = vmatprep.subr.mxu0 0.0
        %625 = vmatpush1.msra.mxu0 0.0
        %626 = vmatprep.subr.mxu0 0.0
        %627 = vmatpush1.msra.mxu0 0.0
        %628 = vmatprep.subr.mxu0 0.0
        %629 = vmatpush1.msra.mxu0 0.0
        %630 = vmatprep.subr.mxu0 0.0
        %631 = vmatpush1.msra.mxu0 0.0
        %632 = vmatprep.subr.mxu0 0.0
        %633 = vmatpush1.msra.mxu0 0.0
        %634 = vmatprep.subr.mxu0 0.0
        %635 = vmatpush1.msra.mxu0 0.0
        %636 = vmatprep.subr.mxu0 0.0
        %637 = vmatpush1.msra.mxu0 0.0
        %638 = vmatprep.subr.mxu0 0.0
        %639 = vmatpush1.msra.mxu0 0.0
        %640 = vmatprep.subr.mxu0 %v608
        %641 = vmatpush1.msra.mxu0 %v605
        %642 = vmatprep.subr.mxu0 0.0
        %643 = vmatpush2.msra.mxu0 0.0
        %644 = vmatprep.subr.mxu0 0.0
        %645 = vmatpush2.msra.mxu0 0.0
        %646 = vmatprep.subr.mxu0 0.0
        %647 = vmatpush2.msra.mxu0 0.0
        %648 = vmatprep.subr.mxu0 0.0
        %649 = vmatpush2.msra.mxu0 0.0
        %650 = vmatprep.subr.mxu0 0.0
        %651 = vmatpush2.msra.mxu0 0.0
        %652 = vmatprep.subr.mxu0 0.0
        %653 = vmatpush2.msra.mxu0 0.0
        %654 = vmatprep.subr.mxu0 0.0
        %655 = vmatpush2.msra.mxu0 0.0
        %656 = vmatprep.subr.mxu0 0.0
        %657 = vmatpush2.msra.mxu0 0.0
        %658 = vmatprep.subr.mxu0 0.0
        %659 = vmatpush2.msra.mxu0 0.0
        %660 = vmatprep.subr.mxu0 0.0
        %661 = vmatpush2.msra.mxu0 0.0
        %662 = vmatprep.subr.mxu0 0.0
        %663 = vmatpush2.msra.mxu0 0.0
        %664 = vmatprep.subr.mxu0 0.0
        %665 = vmatpush2.msra.mxu0 0.0
        %666 = vmatprep.subr.mxu0 0.0
        %667 = vmatpush2.msra.mxu0 0.0
        %668 = vmatprep.subr.mxu0 0.0
        %669 = vmatpush2.msra.mxu0 0.0
        %670 = vmatprep.subr.mxu0 0.0
        %671 = vmatpush2.msra.mxu0 0.0
        %672 = vmatprep.subr.mxu0 0.0
        %673 = vmatpush2.msra.mxu0 0.0
        %674 = vmatprep.mubr.f32.mxu0 0.0
        %675 = vmatmul.mubr.f32.gmra.mxu0 %v525
        %v676 = vpop.f32.mrf.mxu0
        %v677 = vadd.f32 %v520, %v676
        %v678 = vpop.f32.mrf.mxu0
        %v679 = vadd.f32 %v522, %v678
        %680 = vdwg.mxu0
        %681 = vrot.lane.b32.xlu0 %v287, 15
        %v682 = vpop.permute.xlu0 %681
        %683 = vrot.lane.b32.xlu0 %v295, 15
        %v684 = vpop.permute.xlu0 %683
        %685 = vrot.lane.b32.xlu0 %v288, 15
        %v686 = vpop.permute.xlu0 %685
        %687 = vrot.lane.b32.xlu0 %v296, 15
        %v688 = vpop.permute.xlu0 %687
        %vm689 = vcmp.lt.s32.totalorder %v310, 15
        %v690 = vsel %vm689, %v682, %v686
        %v691 = vsel %vm689, %v684, %v688
        %v692 = vsel %vm689, %v686, %v682
        %v693 = vsel %vm689, %v688, %v684
        %s694 = scalar_lea.vmem %s2, 4
        %v695 = vld [vmem:[%s694] sm:$0x3]
        %v697 = vlaneseq
        %v698 = vshrl.u32 %v697, 7
        %v699 = vsub.s32 0, %v698
        %v700 = vrot.slane %v695, %v699
        %v701 = vlaneseq
        %v702 = vshrl.u32 %v701, 7
        %v703 = vsub.s32 1, %v702
        %v704 = vrot.slane %v695, %v703
        %v707 = vmul.f32 %v692, %v700
        %v708 = vmul.f32 %v690, %v704
        %v709 = vmul.f32 %v693, %v700
        %v710 = vmul.f32 %v691, %v704
        %s711 = scalar_lea.vmem %s272, 8
        %v712 = vld [vmem:[%s711] sm:$0x7]
        %v714 = vsel %vm365, %v712, 0
        %v717 = vsel %vm369, %v707, 0
        %v720 = vsel %vm369, %v708, 0
        %722 = vmatprep.subr.mxu0 0.0
        %723 = vmatpush1.msra.mxu0 0.0
        %724 = vmatprep.subr.mxu0 0.0
        %725 = vmatpush1.msra.mxu0 0.0
        %726 = vmatprep.subr.mxu0 0.0
        %727 = vmatpush1.msra.mxu0 0.0
        %728 = vmatprep.subr.mxu0 0.0
        %729 = vmatpush1.msra.mxu0 0.0
        %730 = vmatprep.subr.mxu0 0.0
        %731 = vmatpush1.msra.mxu0 0.0
        %732 = vmatprep.subr.mxu0 0.0
        %733 = vmatpush1.msra.mxu0 0.0
        %734 = vmatprep.subr.mxu0 0.0
        %735 = vmatpush1.msra.mxu0 0.0
        %736 = vmatprep.subr.mxu0 0.0
        %737 = vmatpush1.msra.mxu0 0.0
        %738 = vmatprep.subr.mxu0 0.0
        %739 = vmatpush1.msra.mxu0 0.0
        %740 = vmatprep.subr.mxu0 0.0
        %741 = vmatpush1.msra.mxu0 0.0
        %742 = vmatprep.subr.mxu0 0.0
        %743 = vmatpush1.msra.mxu0 0.0
        %744 = vmatprep.subr.mxu0 0.0
        %745 = vmatpush1.msra.mxu0 0.0
        %746 = vmatprep.subr.mxu0 0.0
        %747 = vmatpush1.msra.mxu0 0.0
        %748 = vmatprep.subr.mxu0 0.0
        %749 = vmatpush1.msra.mxu0 0.0
        %750 = vmatprep.subr.mxu0 0.0
        %751 = vmatpush1.msra.mxu0 0.0
        %752 = vmatprep.subr.mxu0 %v720
        %753 = vmatpush1.msra.mxu0 %v717
        %754 = vmatprep.subr.mxu0 0.0
        %755 = vmatpush2.msra.mxu0 0.0
        %756 = vmatprep.subr.mxu0 0.0
        %757 = vmatpush2.msra.mxu0 0.0
        %758 = vmatprep.subr.mxu0 0.0
        %759 = vmatpush2.msra.mxu0 0.0
        %760 = vmatprep.subr.mxu0 0.0
        %761 = vmatpush2.msra.mxu0 0.0
        %762 = vmatprep.subr.mxu0 0.0
        %763 = vmatpush2.msra.mxu0 0.0
        %764 = vmatprep.subr.mxu0 0.0
        %765 = vmatpush2.msra.mxu0 0.0
        %766 = vmatprep.subr.mxu0 0.0
        %767 = vmatpush2.msra.mxu0 0.0
        %768 = vmatprep.subr.mxu0 0.0
        %769 = vmatpush2.msra.mxu0 0.0
        %770 = vmatprep.subr.mxu0 0.0
        %771 = vmatpush2.msra.mxu0 0.0
        %772 = vmatprep.subr.mxu0 0.0
        %773 = vmatpush2.msra.mxu0 0.0
        %774 = vmatprep.subr.mxu0 0.0
        %775 = vmatpush2.msra.mxu0 0.0
        %776 = vmatprep.subr.mxu0 0.0
        %777 = vmatpush2.msra.mxu0 0.0
        %778 = vmatprep.subr.mxu0 0.0
        %779 = vmatpush2.msra.mxu0 0.0
        %780 = vmatprep.subr.mxu0 0.0
        %781 = vmatpush2.msra.mxu0 0.0
        %782 = vmatprep.subr.mxu0 0.0
        %783 = vmatpush2.msra.mxu0 0.0
        %784 = vmatprep.subr.mxu0 0.0
        %785 = vmatpush2.msra.mxu0 0.0
        %786 = vmatprep.mubr.f32.mxu0 0.0
        %787 = vmatmul.mubr.f32.gmra.mxu0 %v714
        %v788 = vpop.f32.mrf.mxu0
        %v789 = vadd.f32 0.0, %v788
        %v790 = vpop.f32.mrf.mxu0
        %v791 = vadd.f32 0.0, %v790
        %792 = vdwg.mxu0
        %v794 = vsel %vm369, %v709, 0
        %v797 = vsel %vm369, %v710, 0
        %799 = vmatprep.subr.mxu0 0.0
        %800 = vmatpush1.msra.mxu0 0.0
        %801 = vmatprep.subr.mxu0 0.0
        %802 = vmatpush1.msra.mxu0 0.0
        %803 = vmatprep.subr.mxu0 0.0
        %804 = vmatpush1.msra.mxu0 0.0
        %805 = vmatprep.subr.mxu0 0.0
        %806 = vmatpush1.msra.mxu0 0.0
        %807 = vmatprep.subr.mxu0 0.0
        %808 = vmatpush1.msra.mxu0 0.0
        %809 = vmatprep.subr.mxu0 0.0
        %810 = vmatpush1.msra.mxu0 0.0
        %811 = vmatprep.subr.mxu0 0.0
        %812 = vmatpush1.msra.mxu0 0.0
        %813 = vmatprep.subr.mxu0 0.0
        %814 = vmatpush1.msra.mxu0 0.0
        %815 = vmatprep.subr.mxu0 0.0
        %816 = vmatpush1.msra.mxu0 0.0
        %817 = vmatprep.subr.mxu0 0.0
        %818 = vmatpush1.msra.mxu0 0.0
        %819 = vmatprep.subr.mxu0 0.0
        %820 = vmatpush1.msra.mxu0 0.0
        %821 = vmatprep.subr.mxu0 0.0
        %822 = vmatpush1.msra.mxu0 0.0
        %823 = vmatprep.subr.mxu0 0.0
        %824 = vmatpush1.msra.mxu0 0.0
        %825 = vmatprep.subr.mxu0 0.0
        %826 = vmatpush1.msra.mxu0 0.0
        %827 = vmatprep.subr.mxu0 0.0
        %828 = vmatpush1.msra.mxu0 0.0
        %829 = vmatprep.subr.mxu0 %v797
        %830 = vmatpush1.msra.mxu0 %v794
        %831 = vmatprep.subr.mxu0 0.0
        %832 = vmatpush2.msra.mxu0 0.0
        %833 = vmatprep.subr.mxu0 0.0
        %834 = vmatpush2.msra.mxu0 0.0
        %835 = vmatprep.subr.mxu0 0.0
        %836 = vmatpush2.msra.mxu0 0.0
        %837 = vmatprep.subr.mxu0 0.0
        %838 = vmatpush2.msra.mxu0 0.0
        %839 = vmatprep.subr.mxu0 0.0
        %840 = vmatpush2.msra.mxu0 0.0
        %841 = vmatprep.subr.mxu0 0.0
        %842 = vmatpush2.msra.mxu0 0.0
        %843 = vmatprep.subr.mxu0 0.0
        %844 = vmatpush2.msra.mxu0 0.0
        %845 = vmatprep.subr.mxu0 0.0
        %846 = vmatpush2.msra.mxu0 0.0
        %847 = vmatprep.subr.mxu0 0.0
        %848 = vmatpush2.msra.mxu0 0.0
        %849 = vmatprep.subr.mxu0 0.0
        %850 = vmatpush2.msra.mxu0 0.0
        %851 = vmatprep.subr.mxu0 0.0
        %852 = vmatpush2.msra.mxu0 0.0
        %853 = vmatprep.subr.mxu0 0.0
        %854 = vmatpush2.msra.mxu0 0.0
        %855 = vmatprep.subr.mxu0 0.0
        %856 = vmatpush2.msra.mxu0 0.0
        %857 = vmatprep.subr.mxu0 0.0
        %858 = vmatpush2.msra.mxu0 0.0
        %859 = vmatprep.subr.mxu0 0.0
        %860 = vmatpush2.msra.mxu0 0.0
        %861 = vmatprep.subr.mxu0 0.0
        %862 = vmatpush2.msra.mxu0 0.0
        %863 = vmatprep.mubr.f32.mxu0 0.0
        %864 = vmatmul.mubr.f32.gmra.mxu0 %v714
        %v865 = vpop.f32.mrf.mxu0
        %v866 = vadd.f32 0.0, %v865
        %v867 = vpop.f32.mrf.mxu0
        %v868 = vadd.f32 0.0, %v867
        %869 = vdwg.mxu0
        %v870 = vadd.f32 %v600, %v789
        %v871 = vadd.f32 %v602, %v791
        %v872 = vadd.f32 %v677, %v866
        %v873 = vadd.f32 %v679, %v868
        %874 = vrot.lane.b32.xlu0 %v287, 1
        %v875 = vpop.permute.xlu0 %874
        %876 = vrot.lane.b32.xlu0 %v295, 1
        %v877 = vpop.permute.xlu0 %876
        %878 = vrot.lane.b32.xlu0 %v288, 1
        %v879 = vpop.permute.xlu0 %878
        %880 = vrot.lane.b32.xlu0 %v296, 1
        %v881 = vpop.permute.xlu0 %880
        %vm882 = vcmp.lt.s32.totalorder %v310, 1
        %v883 = vsel %vm882, %v875, %v879
        %v884 = vsel %vm882, %v877, %v881
        %v885 = vsel %vm882, %v879, %v875
        %v886 = vsel %vm882, %v881, %v877
        %s887 = scalar_lea.vmem %s2, 6
        %v888 = vld [vmem:[%s887] sm:$0x3]
        %v890 = vlaneseq
        %v891 = vshrl.u32 %v890, 7
        %v892 = vsub.s32 0, %v891
        %v893 = vrot.slane %v888, %v892
        %v894 = vlaneseq
        %v895 = vshrl.u32 %v894, 7
        %v896 = vsub.s32 1, %v895
        %v897 = vrot.slane %v888, %v896
        %v900 = vmul.f32 %v885, %v893
        %v901 = vmul.f32 %v883, %v897
        %v902 = vmul.f32 %v886, %v893
        %v903 = vmul.f32 %v884, %v897
        %s904 = scalar_lea.vmem %s272, 12
        %v905 = vld [vmem:[%s904] sm:$0x7]
        %v907 = vsel %vm365, %v905, 0
        %v910 = vsel %vm369, %v900, 0
        %v913 = vsel %vm369, %v901, 0
        %915 = vmatprep.subr.mxu0 0.0
        %916 = vmatpush1.msra.mxu0 0.0
        %917 = vmatprep.subr.mxu0 0.0
        %918 = vmatpush1.msra.mxu0 0.0
        %919 = vmatprep.subr.mxu0 0.0
        %920 = vmatpush1.msra.mxu0 0.0
        %921 = vmatprep.subr.mxu0 0.0
        %922 = vmatpush1.msra.mxu0 0.0
        %923 = vmatprep.subr.mxu0 0.0
        %924 = vmatpush1.msra.mxu0 0.0
        %925 = vmatprep.subr.mxu0 0.0
        %926 = vmatpush1.msra.mxu0 0.0
        %927 = vmatprep.subr.mxu0 0.0
        %928 = vmatpush1.msra.mxu0 0.0
        %929 = vmatprep.subr.mxu0 0.0
        %930 = vmatpush1.msra.mxu0 0.0
        %931 = vmatprep.subr.mxu0 0.0
        %932 = vmatpush1.msra.mxu0 0.0
        %933 = vmatprep.subr.mxu0 0.0
        %934 = vmatpush1.msra.mxu0 0.0
        %935 = vmatprep.subr.mxu0 0.0
        %936 = vmatpush1.msra.mxu0 0.0
        %937 = vmatprep.subr.mxu0 0.0
        %938 = vmatpush1.msra.mxu0 0.0
        %939 = vmatprep.subr.mxu0 0.0
        %940 = vmatpush1.msra.mxu0 0.0
        %941 = vmatprep.subr.mxu0 0.0
        %942 = vmatpush1.msra.mxu0 0.0
        %943 = vmatprep.subr.mxu0 0.0
        %944 = vmatpush1.msra.mxu0 0.0
        %945 = vmatprep.subr.mxu0 %v913
        %946 = vmatpush1.msra.mxu0 %v910
        %947 = vmatprep.subr.mxu0 0.0
        %948 = vmatpush2.msra.mxu0 0.0
        %949 = vmatprep.subr.mxu0 0.0
        %950 = vmatpush2.msra.mxu0 0.0
        %951 = vmatprep.subr.mxu0 0.0
        %952 = vmatpush2.msra.mxu0 0.0
        %953 = vmatprep.subr.mxu0 0.0
        %954 = vmatpush2.msra.mxu0 0.0
        %955 = vmatprep.subr.mxu0 0.0
        %956 = vmatpush2.msra.mxu0 0.0
        %957 = vmatprep.subr.mxu0 0.0
        %958 = vmatpush2.msra.mxu0 0.0
        %959 = vmatprep.subr.mxu0 0.0
        %960 = vmatpush2.msra.mxu0 0.0
        %961 = vmatprep.subr.mxu0 0.0
        %962 = vmatpush2.msra.mxu0 0.0
        %963 = vmatprep.subr.mxu0 0.0
        %964 = vmatpush2.msra.mxu0 0.0
        %965 = vmatprep.subr.mxu0 0.0
        %966 = vmatpush2.msra.mxu0 0.0
        %967 = vmatprep.subr.mxu0 0.0
        %968 = vmatpush2.msra.mxu0 0.0
        %969 = vmatprep.subr.mxu0 0.0
        %970 = vmatpush2.msra.mxu0 0.0
        %971 = vmatprep.subr.mxu0 0.0
        %972 = vmatpush2.msra.mxu0 0.0
        %973 = vmatprep.subr.mxu0 0.0
        %974 = vmatpush2.msra.mxu0 0.0
        %975 = vmatprep.subr.mxu0 0.0
        %976 = vmatpush2.msra.mxu0 0.0
        %977 = vmatprep.subr.mxu0 0.0
        %978 = vmatpush2.msra.mxu0 0.0
        %979 = vmatprep.mubr.f32.mxu0 0.0
        %980 = vmatmul.mubr.f32.gmra.mxu0 %v907
        %v981 = vpop.f32.mrf.mxu0
        %v982 = vadd.f32 0.0, %v981
        %v983 = vpop.f32.mrf.mxu0
        %v984 = vadd.f32 0.0, %v983
        %985 = vdwg.mxu0
        %v987 = vsel %vm369, %v902, 0
        %v990 = vsel %vm369, %v903, 0
        %992 = vmatprep.subr.mxu0 0.0
        %993 = vmatpush1.msra.mxu0 0.0
        %994 = vmatprep.subr.mxu0 0.0
        %995 = vmatpush1.msra.mxu0 0.0
        %996 = vmatprep.subr.mxu0 0.0
        %997 = vmatpush1.msra.mxu0 0.0
        %998 = vmatprep.subr.mxu0 0.0
        %999 = vmatpush1.msra.mxu0 0.0
        %1000 = vmatprep.subr.mxu0 0.0
        %1001 = vmatpush1.msra.mxu0 0.0
        %1002 = vmatprep.subr.mxu0 0.0
        %1003 = vmatpush1.msra.mxu0 0.0
        %1004 = vmatprep.subr.mxu0 0.0
        %1005 = vmatpush1.msra.mxu0 0.0
        %1006 = vmatprep.subr.mxu0 0.0
        %1007 = vmatpush1.msra.mxu0 0.0
        %1008 = vmatprep.subr.mxu0 0.0
        %1009 = vmatpush1.msra.mxu0 0.0
        %1010 = vmatprep.subr.mxu0 0.0
        %1011 = vmatpush1.msra.mxu0 0.0
        %1012 = vmatprep.subr.mxu0 0.0
        %1013 = vmatpush1.msra.mxu0 0.0
        %1014 = vmatprep.subr.mxu0 0.0
        %1015 = vmatpush1.msra.mxu0 0.0
        %1016 = vmatprep.subr.mxu0 0.0
        %1017 = vmatpush1.msra.mxu0 0.0
        %1018 = vmatprep.subr.mxu0 0.0
        %1019 = vmatpush1.msra.mxu0 0.0
        %1020 = vmatprep.subr.mxu0 0.0
        %1021 = vmatpush1.msra.mxu0 0.0
        %1022 = vmatprep.subr.mxu0 %v990
        %1023 = vmatpush1.msra.mxu0 %v987
        %1024 = vmatprep.subr.mxu0 0.0
        %1025 = vmatpush2.msra.mxu0 0.0
        %1026 = vmatprep.subr.mxu0 0.0
        %1027 = vmatpush2.msra.mxu0 0.0
        %1028 = vmatprep.subr.mxu0 0.0
        %1029 = vmatpush2.msra.mxu0 0.0
        %1030 = vmatprep.subr.mxu0 0.0
        %1031 = vmatpush2.msra.mxu0 0.0
        %1032 = vmatprep.subr.mxu0 0.0
        %1033 = vmatpush2.msra.mxu0 0.0
        %1034 = vmatprep.subr.mxu0 0.0
        %1035 = vmatpush2.msra.mxu0 0.0
        %1036 = vmatprep.subr.mxu0 0.0
        %1037 = vmatpush2.msra.mxu0 0.0
        %1038 = vmatprep.subr.mxu0 0.0
        %1039 = vmatpush2.msra.mxu0 0.0
        %1040 = vmatprep.subr.mxu0 0.0
        %1041 = vmatpush2.msra.mxu0 0.0
        %1042 = vmatprep.subr.mxu0 0.0
        %1043 = vmatpush2.msra.mxu0 0.0
        %1044 = vmatprep.subr.mxu0 0.0
        %1045 = vmatpush2.msra.mxu0 0.0
        %1046 = vmatprep.subr.mxu0 0.0
        %1047 = vmatpush2.msra.mxu0 0.0
        %1048 = vmatprep.subr.mxu0 0.0
        %1049 = vmatpush2.msra.mxu0 0.0
        %1050 = vmatprep.subr.mxu0 0.0
        %1051 = vmatpush2.msra.mxu0 0.0
        %1052 = vmatprep.subr.mxu0 0.0
        %1053 = vmatpush2.msra.mxu0 0.0
        %1054 = vmatprep.subr.mxu0 0.0
        %1055 = vmatpush2.msra.mxu0 0.0
        %1056 = vmatprep.mubr.f32.mxu0 0.0
        %1057 = vmatmul.mubr.f32.gmra.mxu0 %v907
        %v1058 = vpop.f32.mrf.mxu0
        %v1059 = vadd.f32 0.0, %v1058
        %v1060 = vpop.f32.mrf.mxu0
        %v1061 = vadd.f32 0.0, %v1060
        %1062 = vdwg.mxu0
        %v1063 = vadd.f32 %v870, %v982
        %v1064 = vadd.f32 %v871, %v984
        %v1065 = vadd.f32 %v872, %v1059
        %v1066 = vadd.f32 %v873, %v1061
        %s1067 = scalar_lea.vmem %s272, 16
        %v1068 = vld [vmem:[%s1067] sm:$0x7]
        %v1070 = vsel %vm365, %v1068, 0
        %v1072 = vsel %vm369, %v287, 0
        %v1074 = vsel %vm369, %v288, 0
        %1076 = vmatprep.subr.mxu0 0.0
        %1077 = vmatpush1.msra.mxu0 0.0
        %1078 = vmatprep.subr.mxu0 0.0
        %1079 = vmatpush1.msra.mxu0 0.0
        %1080 = vmatprep.subr.mxu0 0.0
        %1081 = vmatpush1.msra.mxu0 0.0
        %1082 = vmatprep.subr.mxu0 0.0
        %1083 = vmatpush1.msra.mxu0 0.0
        %1084 = vmatprep.subr.mxu0 0.0
        %1085 = vmatpush1.msra.mxu0 0.0
        %1086 = vmatprep.subr.mxu0 0.0
        %1087 = vmatpush1.msra.mxu0 0.0
        %1088 = vmatprep.subr.mxu0 0.0
        %1089 = vmatpush1.msra.mxu0 0.0
        %1090 = vmatprep.subr.mxu0 0.0
        %1091 = vmatpush1.msra.mxu0 0.0
        %1092 = vmatprep.subr.mxu0 0.0
        %1093 = vmatpush1.msra.mxu0 0.0
        %1094 = vmatprep.subr.mxu0 0.0
        %1095 = vmatpush1.msra.mxu0 0.0
        %1096 = vmatprep.subr.mxu0 0.0
        %1097 = vmatpush1.msra.mxu0 0.0
        %1098 = vmatprep.subr.mxu0 0.0
        %1099 = vmatpush1.msra.mxu0 0.0
        %1100 = vmatprep.subr.mxu0 0.0
        %1101 = vmatpush1.msra.mxu0 0.0
        %1102 = vmatprep.subr.mxu0 0.0
        %1103 = vmatpush1.msra.mxu0 0.0
        %1104 = vmatprep.subr.mxu0 0.0
        %1105 = vmatpush1.msra.mxu0 0.0
        %1106 = vmatprep.subr.mxu0 %v1074
        %1107 = vmatpush1.msra.mxu0 %v1072
        %1108 = vmatprep.subr.mxu0 0.0
        %1109 = vmatpush2.msra.mxu0 0.0
        %1110 = vmatprep.subr.mxu0 0.0
        %1111 = vmatpush2.msra.mxu0 0.0
        %1112 = vmatprep.subr.mxu0 0.0
        %1113 = vmatpush2.msra.mxu0 0.0
        %1114 = vmatprep.subr.mxu0 0.0
        %1115 = vmatpush2.msra.mxu0 0.0
        %1116 = vmatprep.subr.mxu0 0.0
        %1117 = vmatpush2.msra.mxu0 0.0
        %1118 = vmatprep.subr.mxu0 0.0
        %1119 = vmatpush2.msra.mxu0 0.0
        %1120 = vmatprep.subr.mxu0 0.0
        %1121 = vmatpush2.msra.mxu0 0.0
        %1122 = vmatprep.subr.mxu0 0.0
        %1123 = vmatpush2.msra.mxu0 0.0
        %1124 = vmatprep.subr.mxu0 0.0
        %1125 = vmatpush2.msra.mxu0 0.0
        %1126 = vmatprep.subr.mxu0 0.0
        %1127 = vmatpush2.msra.mxu0 0.0
        %1128 = vmatprep.subr.mxu0 0.0
        %1129 = vmatpush2.msra.mxu0 0.0
        %1130 = vmatprep.subr.mxu0 0.0
        %1131 = vmatpush2.msra.mxu0 0.0
        %1132 = vmatprep.subr.mxu0 0.0
        %1133 = vmatpush2.msra.mxu0 0.0
        %1134 = vmatprep.subr.mxu0 0.0
        %1135 = vmatpush2.msra.mxu0 0.0
        %1136 = vmatprep.subr.mxu0 0.0
        %1137 = vmatpush2.msra.mxu0 0.0
        %1138 = vmatprep.subr.mxu0 0.0
        %1139 = vmatpush2.msra.mxu0 0.0
        %1140 = vmatprep.mubr.f32.mxu0 0.0
        %1141 = vmatmul.mubr.f32.gmra.mxu0 %v1070
        %v1142 = vpop.f32.mrf.mxu0
        %v1143 = vadd.f32 0.0, %v1142
        %v1144 = vpop.f32.mrf.mxu0
        %v1145 = vadd.f32 0.0, %v1144
        %1146 = vdwg.mxu0
        %v1147 = vsel %vm369, %v295, 0
        %v1149 = vsel %vm369, %v296, 0
        %1151 = vmatprep.subr.mxu0 0.0
        %1152 = vmatpush1.msra.mxu0 0.0
        %1153 = vmatprep.subr.mxu0 0.0
        %1154 = vmatpush1.msra.mxu0 0.0
        %1155 = vmatprep.subr.mxu0 0.0
        %1156 = vmatpush1.msra.mxu0 0.0
        %1157 = vmatprep.subr.mxu0 0.0
        %1158 = vmatpush1.msra.mxu0 0.0
        %1159 = vmatprep.subr.mxu0 0.0
        %1160 = vmatpush1.msra.mxu0 0.0
        %1161 = vmatprep.subr.mxu0 0.0
        %1162 = vmatpush1.msra.mxu0 0.0
        %1163 = vmatprep.subr.mxu0 0.0
        %1164 = vmatpush1.msra.mxu0 0.0
        %1165 = vmatprep.subr.mxu0 0.0
        %1166 = vmatpush1.msra.mxu0 0.0
        %1167 = vmatprep.subr.mxu0 0.0
        %1168 = vmatpush1.msra.mxu0 0.0
        %1169 = vmatprep.subr.mxu0 0.0
        %1170 = vmatpush1.msra.mxu0 0.0
        %1171 = vmatprep.subr.mxu0 0.0
        %1172 = vmatpush1.msra.mxu0 0.0
        %1173 = vmatprep.subr.mxu0 0.0
        %1174 = vmatpush1.msra.mxu0 0.0
        %1175 = vmatprep.subr.mxu0 0.0
        %1176 = vmatpush1.msra.mxu0 0.0
        %1177 = vmatprep.subr.mxu0 0.0
        %1178 = vmatpush1.msra.mxu0 0.0
        %1179 = vmatprep.subr.mxu0 0.0
        %1180 = vmatpush1.msra.mxu0 0.0
        %1181 = vmatprep.subr.mxu0 %v1149
        %1182 = vmatpush1.msra.mxu0 %v1147
        %1183 = vmatprep.subr.mxu0 0.0
        %1184 = vmatpush2.msra.mxu0 0.0
        %1185 = vmatprep.subr.mxu0 0.0
        %1186 = vmatpush2.msra.mxu0 0.0
        %1187 = vmatprep.subr.mxu0 0.0
        %1188 = vmatpush2.msra.mxu0 0.0
        %1189 = vmatprep.subr.mxu0 0.0
        %1190 = vmatpush2.msra.mxu0 0.0
        %1191 = vmatprep.subr.mxu0 0.0
        %1192 = vmatpush2.msra.mxu0 0.0
        %1193 = vmatprep.subr.mxu0 0.0
        %1194 = vmatpush2.msra.mxu0 0.0
        %1195 = vmatprep.subr.mxu0 0.0
        %1196 = vmatpush2.msra.mxu0 0.0
        %1197 = vmatprep.subr.mxu0 0.0
        %1198 = vmatpush2.msra.mxu0 0.0
        %1199 = vmatprep.subr.mxu0 0.0
        %1200 = vmatpush2.msra.mxu0 0.0
        %1201 = vmatprep.subr.mxu0 0.0
        %1202 = vmatpush2.msra.mxu0 0.0
        %1203 = vmatprep.subr.mxu0 0.0
        %1204 = vmatpush2.msra.mxu0 0.0
        %1205 = vmatprep.subr.mxu0 0.0
        %1206 = vmatpush2.msra.mxu0 0.0
        %1207 = vmatprep.subr.mxu0 0.0
        %1208 = vmatpush2.msra.mxu0 0.0
        %1209 = vmatprep.subr.mxu0 0.0
        %1210 = vmatpush2.msra.mxu0 0.0
        %1211 = vmatprep.subr.mxu0 0.0
        %1212 = vmatpush2.msra.mxu0 0.0
        %1213 = vmatprep.subr.mxu0 0.0
        %1214 = vmatpush2.msra.mxu0 0.0
        %1215 = vmatprep.mubr.f32.mxu0 0.0
        %1216 = vmatmul.mubr.f32.gmra.mxu0 %v1070
        %v1217 = vpop.f32.mrf.mxu0
        %v1218 = vadd.f32 0.0, %v1217
        %v1219 = vpop.f32.mrf.mxu0
        %v1220 = vadd.f32 0.0, %v1219
        %1221 = vdwg.mxu0
        %v1222 = vadd.f32 %v1063, %v1143
        %v1223 = vadd.f32 %v1064, %v1145
        %v1224 = vadd.f32 %v1065, %v1218
        %v1225 = vadd.f32 %v1066, %v1220
        %1226 = vrot.lane.b32.xlu0 %v287, 127
        %v1227 = vpop.permute.xlu0 %1226
        %1228 = vrot.lane.b32.xlu0 %v295, 127
        %v1229 = vpop.permute.xlu0 %1228
        %1230 = vrot.lane.b32.xlu0 %v288, 127
        %v1231 = vpop.permute.xlu0 %1230
        %1232 = vrot.lane.b32.xlu0 %v296, 127
        %v1233 = vpop.permute.xlu0 %1232
        %vm1234 = vcmp.lt.s32.totalorder %v310, 127
        %v1235 = vsel %vm1234, %v1227, %v1231
        %v1236 = vsel %vm1234, %v1229, %v1233
        %v1237 = vsel %vm1234, %v1231, %v1227
        %v1238 = vsel %vm1234, %v1233, %v1229
        %s1239 = scalar_lea.vmem %s2, 10
        %v1240 = vld [vmem:[%s1239] sm:$0x3]
        %v1242 = vlaneseq
        %v1243 = vshrl.u32 %v1242, 7
        %v1244 = vsub.s32 0, %v1243
        %v1245 = vrot.slane %v1240, %v1244
        %v1246 = vlaneseq
        %v1247 = vshrl.u32 %v1246, 7
        %v1248 = vsub.s32 1, %v1247
        %v1249 = vrot.slane %v1240, %v1248
        %v1252 = vmul.f32 %v1235, %v1245
        %v1253 = vmul.f32 %v1237, %v1249
        %v1254 = vmul.f32 %v1236, %v1245
        %v1255 = vmul.f32 %v1238, %v1249
        %s1256 = scalar_lea.vmem %s272, 20
        %v1257 = vld [vmem:[%s1256] sm:$0x7]
        %v1259 = vsel %vm365, %v1257, 0
        %v1262 = vsel %vm369, %v1252, 0
        %v1265 = vsel %vm369, %v1253, 0
        %1267 = vmatprep.subr.mxu0 0.0
        %1268 = vmatpush1.msra.mxu0 0.0
        %1269 = vmatprep.subr.mxu0 0.0
        %1270 = vmatpush1.msra.mxu0 0.0
        %1271 = vmatprep.subr.mxu0 0.0
        %1272 = vmatpush1.msra.mxu0 0.0
        %1273 = vmatprep.subr.mxu0 0.0
        %1274 = vmatpush1.msra.mxu0 0.0
        %1275 = vmatprep.subr.mxu0 0.0
        %1276 = vmatpush1.msra.mxu0 0.0
        %1277 = vmatprep.subr.mxu0 0.0
        %1278 = vmatpush1.msra.mxu0 0.0
        %1279 = vmatprep.subr.mxu0 0.0
        %1280 = vmatpush1.msra.mxu0 0.0
        %1281 = vmatprep.subr.mxu0 0.0
        %1282 = vmatpush1.msra.mxu0 0.0
        %1283 = vmatprep.subr.mxu0 0.0
        %1284 = vmatpush1.msra.mxu0 0.0
        %1285 = vmatprep.subr.mxu0 0.0
        %1286 = vmatpush1.msra.mxu0 0.0
        %1287 = vmatprep.subr.mxu0 0.0
        %1288 = vmatpush1.msra.mxu0 0.0
        %1289 = vmatprep.subr.mxu0 0.0
        %1290 = vmatpush1.msra.mxu0 0.0
        %1291 = vmatprep.subr.mxu0 0.0
        %1292 = vmatpush1.msra.mxu0 0.0
        %1293 = vmatprep.subr.mxu0 0.0
        %1294 = vmatpush1.msra.mxu0 0.0
        %1295 = vmatprep.subr.mxu0 0.0
        %1296 = vmatpush1.msra.mxu0 0.0
        %1297 = vmatprep.subr.mxu0 %v1265
        %1298 = vmatpush1.msra.mxu0 %v1262
        %1299 = vmatprep.subr.mxu0 0.0
        %1300 = vmatpush2.msra.mxu0 0.0
        %1301 = vmatprep.subr.mxu0 0.0
        %1302 = vmatpush2.msra.mxu0 0.0
        %1303 = vmatprep.subr.mxu0 0.0
        %1304 = vmatpush2.msra.mxu0 0.0
        %1305 = vmatprep.subr.mxu0 0.0
        %1306 = vmatpush2.msra.mxu0 0.0
        %1307 = vmatprep.subr.mxu0 0.0
        %1308 = vmatpush2.msra.mxu0 0.0
        %1309 = vmatprep.subr.mxu0 0.0
        %1310 = vmatpush2.msra.mxu0 0.0
        %1311 = vmatprep.subr.mxu0 0.0
        %1312 = vmatpush2.msra.mxu0 0.0
        %1313 = vmatprep.subr.mxu0 0.0
        %1314 = vmatpush2.msra.mxu0 0.0
        %1315 = vmatprep.subr.mxu0 0.0
        %1316 = vmatpush2.msra.mxu0 0.0
        %1317 = vmatprep.subr.mxu0 0.0
        %1318 = vmatpush2.msra.mxu0 0.0
        %1319 = vmatprep.subr.mxu0 0.0
        %1320 = vmatpush2.msra.mxu0 0.0
        %1321 = vmatprep.subr.mxu0 0.0
        %1322 = vmatpush2.msra.mxu0 0.0
        %1323 = vmatprep.subr.mxu0 0.0
        %1324 = vmatpush2.msra.mxu0 0.0
        %1325 = vmatprep.subr.mxu0 0.0
        %1326 = vmatpush2.msra.mxu0 0.0
        %1327 = vmatprep.subr.mxu0 0.0
        %1328 = vmatpush2.msra.mxu0 0.0
        %1329 = vmatprep.subr.mxu0 0.0
        %1330 = vmatpush2.msra.mxu0 0.0
        %1331 = vmatprep.mubr.f32.mxu0 0.0
        %1332 = vmatmul.mubr.f32.gmra.mxu0 %v1259
        %v1333 = vpop.f32.mrf.mxu0
        %v1334 = vadd.f32 0.0, %v1333
        %v1335 = vpop.f32.mrf.mxu0
        %v1336 = vadd.f32 0.0, %v1335
        %1337 = vdwg.mxu0
        %v1339 = vsel %vm369, %v1254, 0
        %v1342 = vsel %vm369, %v1255, 0
        %1344 = vmatprep.subr.mxu0 0.0
        %1345 = vmatpush1.msra.mxu0 0.0
        %1346 = vmatprep.subr.mxu0 0.0
        %1347 = vmatpush1.msra.mxu0 0.0
        %1348 = vmatprep.subr.mxu0 0.0
        %1349 = vmatpush1.msra.mxu0 0.0
        %1350 = vmatprep.subr.mxu0 0.0
        %1351 = vmatpush1.msra.mxu0 0.0
        %1352 = vmatprep.subr.mxu0 0.0
        %1353 = vmatpush1.msra.mxu0 0.0
        %1354 = vmatprep.subr.mxu0 0.0
        %1355 = vmatpush1.msra.mxu0 0.0
        %1356 = vmatprep.subr.mxu0 0.0
        %1357 = vmatpush1.msra.mxu0 0.0
        %1358 = vmatprep.subr.mxu0 0.0
        %1359 = vmatpush1.msra.mxu0 0.0
        %1360 = vmatprep.subr.mxu0 0.0
        %1361 = vmatpush1.msra.mxu0 0.0
        %1362 = vmatprep.subr.mxu0 0.0
        %1363 = vmatpush1.msra.mxu0 0.0
        %1364 = vmatprep.subr.mxu0 0.0
        %1365 = vmatpush1.msra.mxu0 0.0
        %1366 = vmatprep.subr.mxu0 0.0
        %1367 = vmatpush1.msra.mxu0 0.0
        %1368 = vmatprep.subr.mxu0 0.0
        %1369 = vmatpush1.msra.mxu0 0.0
        %1370 = vmatprep.subr.mxu0 0.0
        %1371 = vmatpush1.msra.mxu0 0.0
        %1372 = vmatprep.subr.mxu0 0.0
        %1373 = vmatpush1.msra.mxu0 0.0
        %1374 = vmatprep.subr.mxu0 %v1342
        %1375 = vmatpush1.msra.mxu0 %v1339
        %1376 = vmatprep.subr.mxu0 0.0
        %1377 = vmatpush2.msra.mxu0 0.0
        %1378 = vmatprep.subr.mxu0 0.0
        %1379 = vmatpush2.msra.mxu0 0.0
        %1380 = vmatprep.subr.mxu0 0.0
        %1381 = vmatpush2.msra.mxu0 0.0
        %1382 = vmatprep.subr.mxu0 0.0
        %1383 = vmatpush2.msra.mxu0 0.0
        %1384 = vmatprep.subr.mxu0 0.0
        %1385 = vmatpush2.msra.mxu0 0.0
        %1386 = vmatprep.subr.mxu0 0.0
        %1387 = vmatpush2.msra.mxu0 0.0
        %1388 = vmatprep.subr.mxu0 0.0
        %1389 = vmatpush2.msra.mxu0 0.0
        %1390 = vmatprep.subr.mxu0 0.0
        %1391 = vmatpush2.msra.mxu0 0.0
        %1392 = vmatprep.subr.mxu0 0.0
        %1393 = vmatpush2.msra.mxu0 0.0
        %1394 = vmatprep.subr.mxu0 0.0
        %1395 = vmatpush2.msra.mxu0 0.0
        %1396 = vmatprep.subr.mxu0 0.0
        %1397 = vmatpush2.msra.mxu0 0.0
        %1398 = vmatprep.subr.mxu0 0.0
        %1399 = vmatpush2.msra.mxu0 0.0
        %1400 = vmatprep.subr.mxu0 0.0
        %1401 = vmatpush2.msra.mxu0 0.0
        %1402 = vmatprep.subr.mxu0 0.0
        %1403 = vmatpush2.msra.mxu0 0.0
        %1404 = vmatprep.subr.mxu0 0.0
        %1405 = vmatpush2.msra.mxu0 0.0
        %1406 = vmatprep.subr.mxu0 0.0
        %1407 = vmatpush2.msra.mxu0 0.0
        %1408 = vmatprep.mubr.f32.mxu0 0.0
        %1409 = vmatmul.mubr.f32.gmra.mxu0 %v1259
        %v1410 = vpop.f32.mrf.mxu0
        %v1411 = vadd.f32 0.0, %v1410
        %v1412 = vpop.f32.mrf.mxu0
        %v1413 = vadd.f32 0.0, %v1412
        %1414 = vdwg.mxu0
        %v1415 = vadd.f32 %v1222, %v1334
        %v1416 = vadd.f32 %v1223, %v1336
        %v1417 = vadd.f32 %v1224, %v1411
        %v1418 = vadd.f32 %v1225, %v1413
        %1419 = vrot.lane.b32.xlu0 %v287, 113
        %v1420 = vpop.permute.xlu0 %1419
        %1421 = vrot.lane.b32.xlu0 %v295, 113
        %v1422 = vpop.permute.xlu0 %1421
        %1423 = vrot.lane.b32.xlu0 %v288, 113
        %v1424 = vpop.permute.xlu0 %1423
        %1425 = vrot.lane.b32.xlu0 %v296, 113
        %v1426 = vpop.permute.xlu0 %1425
        %vm1427 = vcmp.lt.s32.totalorder %v310, 113
        %v1428 = vsel %vm1427, %v1420, %v1424
        %v1429 = vsel %vm1427, %v1422, %v1426
        %v1430 = vsel %vm1427, %v1424, %v1420
        %v1431 = vsel %vm1427, %v1426, %v1422
        %s1432 = scalar_lea.vmem %s2, 12
        %v1433 = vld [vmem:[%s1432] sm:$0x3]
        %v1435 = vlaneseq
        %v1436 = vshrl.u32 %v1435, 7
        %v1437 = vsub.s32 0, %v1436
        %v1438 = vrot.slane %v1433, %v1437
        %v1439 = vlaneseq
        %v1440 = vshrl.u32 %v1439, 7
        %v1441 = vsub.s32 1, %v1440
        %v1442 = vrot.slane %v1433, %v1441
        %v1445 = vmul.f32 %v1428, %v1438
        %v1446 = vmul.f32 %v1430, %v1442
        %v1447 = vmul.f32 %v1429, %v1438
        %v1448 = vmul.f32 %v1431, %v1442
        %s1449 = scalar_lea.vmem %s272, 24
        %v1450 = vld [vmem:[%s1449] sm:$0x7]
        %v1452 = vsel %vm365, %v1450, 0
        %v1455 = vsel %vm369, %v1445, 0
        %v1458 = vsel %vm369, %v1446, 0
        %1460 = vmatprep.subr.mxu0 0.0
        %1461 = vmatpush1.msra.mxu0 0.0
        %1462 = vmatprep.subr.mxu0 0.0
        %1463 = vmatpush1.msra.mxu0 0.0
        %1464 = vmatprep.subr.mxu0 0.0
        %1465 = vmatpush1.msra.mxu0 0.0
        %1466 = vmatprep.subr.mxu0 0.0
        %1467 = vmatpush1.msra.mxu0 0.0
        %1468 = vmatprep.subr.mxu0 0.0
        %1469 = vmatpush1.msra.mxu0 0.0
        %1470 = vmatprep.subr.mxu0 0.0
        %1471 = vmatpush1.msra.mxu0 0.0
        %1472 = vmatprep.subr.mxu0 0.0
        %1473 = vmatpush1.msra.mxu0 0.0
        %1474 = vmatprep.subr.mxu0 0.0
        %1475 = vmatpush1.msra.mxu0 0.0
        %1476 = vmatprep.subr.mxu0 0.0
        %1477 = vmatpush1.msra.mxu0 0.0
        %1478 = vmatprep.subr.mxu0 0.0
        %1479 = vmatpush1.msra.mxu0 0.0
        %1480 = vmatprep.subr.mxu0 0.0
        %1481 = vmatpush1.msra.mxu0 0.0
        %1482 = vmatprep.subr.mxu0 0.0
        %1483 = vmatpush1.msra.mxu0 0.0
        %1484 = vmatprep.subr.mxu0 0.0
        %1485 = vmatpush1.msra.mxu0 0.0
        %1486 = vmatprep.subr.mxu0 0.0
        %1487 = vmatpush1.msra.mxu0 0.0
        %1488 = vmatprep.subr.mxu0 0.0
        %1489 = vmatpush1.msra.mxu0 0.0
        %1490 = vmatprep.subr.mxu0 %v1458
        %1491 = vmatpush1.msra.mxu0 %v1455
        %1492 = vmatprep.subr.mxu0 0.0
        %1493 = vmatpush2.msra.mxu0 0.0
        %1494 = vmatprep.subr.mxu0 0.0
        %1495 = vmatpush2.msra.mxu0 0.0
        %1496 = vmatprep.subr.mxu0 0.0
        %1497 = vmatpush2.msra.mxu0 0.0
        %1498 = vmatprep.subr.mxu0 0.0
        %1499 = vmatpush2.msra.mxu0 0.0
        %1500 = vmatprep.subr.mxu0 0.0
        %1501 = vmatpush2.msra.mxu0 0.0
        %1502 = vmatprep.subr.mxu0 0.0
        %1503 = vmatpush2.msra.mxu0 0.0
        %1504 = vmatprep.subr.mxu0 0.0
        %1505 = vmatpush2.msra.mxu0 0.0
        %1506 = vmatprep.subr.mxu0 0.0
        %1507 = vmatpush2.msra.mxu0 0.0
        %1508 = vmatprep.subr.mxu0 0.0
        %1509 = vmatpush2.msra.mxu0 0.0
        %1510 = vmatprep.subr.mxu0 0.0
        %1511 = vmatpush2.msra.mxu0 0.0
        %1512 = vmatprep.subr.mxu0 0.0
        %1513 = vmatpush2.msra.mxu0 0.0
        %1514 = vmatprep.subr.mxu0 0.0
        %1515 = vmatpush2.msra.mxu0 0.0
        %1516 = vmatprep.subr.mxu0 0.0
        %1517 = vmatpush2.msra.mxu0 0.0
        %1518 = vmatprep.subr.mxu0 0.0
        %1519 = vmatpush2.msra.mxu0 0.0
        %1520 = vmatprep.subr.mxu0 0.0
        %1521 = vmatpush2.msra.mxu0 0.0
        %1522 = vmatprep.subr.mxu0 0.0
        %1523 = vmatpush2.msra.mxu0 0.0
        %1524 = vmatprep.mubr.f32.mxu0 0.0
        %1525 = vmatmul.mubr.f32.gmra.mxu0 %v1452
        %v1526 = vpop.f32.mrf.mxu0
        %v1527 = vadd.f32 0.0, %v1526
        %v1528 = vpop.f32.mrf.mxu0
        %v1529 = vadd.f32 0.0, %v1528
        %1530 = vdwg.mxu0
        %v1532 = vsel %vm369, %v1447, 0
        %v1535 = vsel %vm369, %v1448, 0
        %1537 = vmatprep.subr.mxu0 0.0
        %1538 = vmatpush1.msra.mxu0 0.0
        %1539 = vmatprep.subr.mxu0 0.0
        %1540 = vmatpush1.msra.mxu0 0.0
        %1541 = vmatprep.subr.mxu0 0.0
        %1542 = vmatpush1.msra.mxu0 0.0
        %1543 = vmatprep.subr.mxu0 0.0
        %1544 = vmatpush1.msra.mxu0 0.0
        %1545 = vmatprep.subr.mxu0 0.0
        %1546 = vmatpush1.msra.mxu0 0.0
        %1547 = vmatprep.subr.mxu0 0.0
        %1548 = vmatpush1.msra.mxu0 0.0
        %1549 = vmatprep.subr.mxu0 0.0
        %1550 = vmatpush1.msra.mxu0 0.0
        %1551 = vmatprep.subr.mxu0 0.0
        %1552 = vmatpush1.msra.mxu0 0.0
        %1553 = vmatprep.subr.mxu0 0.0
        %1554 = vmatpush1.msra.mxu0 0.0
        %1555 = vmatprep.subr.mxu0 0.0
        %1556 = vmatpush1.msra.mxu0 0.0
        %1557 = vmatprep.subr.mxu0 0.0
        %1558 = vmatpush1.msra.mxu0 0.0
        %1559 = vmatprep.subr.mxu0 0.0
        %1560 = vmatpush1.msra.mxu0 0.0
        %1561 = vmatprep.subr.mxu0 0.0
        %1562 = vmatpush1.msra.mxu0 0.0
        %1563 = vmatprep.subr.mxu0 0.0
        %1564 = vmatpush1.msra.mxu0 0.0
        %1565 = vmatprep.subr.mxu0 0.0
        %1566 = vmatpush1.msra.mxu0 0.0
        %1567 = vmatprep.subr.mxu0 %v1535
        %1568 = vmatpush1.msra.mxu0 %v1532
        %1569 = vmatprep.subr.mxu0 0.0
        %1570 = vmatpush2.msra.mxu0 0.0
        %1571 = vmatprep.subr.mxu0 0.0
        %1572 = vmatpush2.msra.mxu0 0.0
        %1573 = vmatprep.subr.mxu0 0.0
        %1574 = vmatpush2.msra.mxu0 0.0
        %1575 = vmatprep.subr.mxu0 0.0
        %1576 = vmatpush2.msra.mxu0 0.0
        %1577 = vmatprep.subr.mxu0 0.0
        %1578 = vmatpush2.msra.mxu0 0.0
        %1579 = vmatprep.subr.mxu0 0.0
        %1580 = vmatpush2.msra.mxu0 0.0
        %1581 = vmatprep.subr.mxu0 0.0
        %1582 = vmatpush2.msra.mxu0 0.0
        %1583 = vmatprep.subr.mxu0 0.0
        %1584 = vmatpush2.msra.mxu0 0.0
        %1585 = vmatprep.subr.mxu0 0.0
        %1586 = vmatpush2.msra.mxu0 0.0
        %1587 = vmatprep.subr.mxu0 0.0
        %1588 = vmatpush2.msra.mxu0 0.0
        %1589 = vmatprep.subr.mxu0 0.0
        %1590 = vmatpush2.msra.mxu0 0.0
        %1591 = vmatprep.subr.mxu0 0.0
        %1592 = vmatpush2.msra.mxu0 0.0
        %1593 = vmatprep.subr.mxu0 0.0
        %1594 = vmatpush2.msra.mxu0 0.0
        %1595 = vmatprep.subr.mxu0 0.0
        %1596 = vmatpush2.msra.mxu0 0.0
        %1597 = vmatprep.subr.mxu0 0.0
        %1598 = vmatpush2.msra.mxu0 0.0
        %1599 = vmatprep.subr.mxu0 0.0
        %1600 = vmatpush2.msra.mxu0 0.0
        %1601 = vmatprep.mubr.f32.mxu0 0.0
        %1602 = vmatmul.mubr.f32.gmra.mxu0 %v1452
        %v1603 = vpop.f32.mrf.mxu0
        %v1604 = vadd.f32 0.0, %v1603
        %v1605 = vpop.f32.mrf.mxu0
        %v1606 = vadd.f32 0.0, %v1605
        %1607 = vdwg.mxu0
        %v1608 = vadd.f32 %v1415, %v1527
        %v1609 = vadd.f32 %v1416, %v1529
        %v1610 = vadd.f32 %v1417, %v1604
        %v1611 = vadd.f32 %v1418, %v1606
        %1612 = vrot.lane.b32.xlu0 %v287, 112
        %v1613 = vpop.permute.xlu0 %1612
        %1614 = vrot.lane.b32.xlu0 %v295, 112
        %v1615 = vpop.permute.xlu0 %1614
        %1616 = vrot.lane.b32.xlu0 %v288, 112
        %v1617 = vpop.permute.xlu0 %1616
        %1618 = vrot.lane.b32.xlu0 %v296, 112
        %v1619 = vpop.permute.xlu0 %1618
        %vm1620 = vcmp.lt.s32.totalorder %v310, 112
        %v1621 = vsel %vm1620, %v1613, %v1617
        %v1622 = vsel %vm1620, %v1615, %v1619
        %v1623 = vsel %vm1620, %v1617, %v1613
        %v1624 = vsel %vm1620, %v1619, %v1615
        %s1625 = scalar_lea.vmem %s2, 14
        %v1626 = vld [vmem:[%s1625] sm:$0x3]
        %v1628 = vlaneseq
        %v1629 = vshrl.u32 %v1628, 7
        %v1630 = vsub.s32 0, %v1629
        %v1631 = vrot.slane %v1626, %v1630
        %v1632 = vlaneseq
        %v1633 = vshrl.u32 %v1632, 7
        %v1634 = vsub.s32 1, %v1633
        %v1635 = vrot.slane %v1626, %v1634
        %v1638 = vmul.f32 %v1621, %v1631
        %v1639 = vmul.f32 %v1623, %v1635
        %v1640 = vmul.f32 %v1622, %v1631
        %v1641 = vmul.f32 %v1624, %v1635
        %s1642 = scalar_lea.vmem %s272, 28
        %v1643 = vld [vmem:[%s1642] sm:$0x7]
        %v1645 = vsel %vm365, %v1643, 0
        %v1648 = vsel %vm369, %v1638, 0
        %v1651 = vsel %vm369, %v1639, 0
        %1653 = vmatprep.subr.mxu0 0.0
        %1654 = vmatpush1.msra.mxu0 0.0
        %1655 = vmatprep.subr.mxu0 0.0
        %1656 = vmatpush1.msra.mxu0 0.0
        %1657 = vmatprep.subr.mxu0 0.0
        %1658 = vmatpush1.msra.mxu0 0.0
        %1659 = vmatprep.subr.mxu0 0.0
        %1660 = vmatpush1.msra.mxu0 0.0
        %1661 = vmatprep.subr.mxu0 0.0
        %1662 = vmatpush1.msra.mxu0 0.0
        %1663 = vmatprep.subr.mxu0 0.0
        %1664 = vmatpush1.msra.mxu0 0.0
        %1665 = vmatprep.subr.mxu0 0.0
        %1666 = vmatpush1.msra.mxu0 0.0
        %1667 = vmatprep.subr.mxu0 0.0
        %1668 = vmatpush1.msra.mxu0 0.0
        %1669 = vmatprep.subr.mxu0 0.0
        %1670 = vmatpush1.msra.mxu0 0.0
        %1671 = vmatprep.subr.mxu0 0.0
        %1672 = vmatpush1.msra.mxu0 0.0
        %1673 = vmatprep.subr.mxu0 0.0
        %1674 = vmatpush1.msra.mxu0 0.0
        %1675 = vmatprep.subr.mxu0 0.0
        %1676 = vmatpush1.msra.mxu0 0.0
        %1677 = vmatprep.subr.mxu0 0.0
        %1678 = vmatpush1.msra.mxu0 0.0
        %1679 = vmatprep.subr.mxu0 0.0
        %1680 = vmatpush1.msra.mxu0 0.0
        %1681 = vmatprep.subr.mxu0 0.0
        %1682 = vmatpush1.msra.mxu0 0.0
        %1683 = vmatprep.subr.mxu0 %v1651
        %1684 = vmatpush1.msra.mxu0 %v1648
        %1685 = vmatprep.subr.mxu0 0.0
        %1686 = vmatpush2.msra.mxu0 0.0
        %1687 = vmatprep.subr.mxu0 0.0
        %1688 = vmatpush2.msra.mxu0 0.0
        %1689 = vmatprep.subr.mxu0 0.0
        %1690 = vmatpush2.msra.mxu0 0.0
        %1691 = vmatprep.subr.mxu0 0.0
        %1692 = vmatpush2.msra.mxu0 0.0
        %1693 = vmatprep.subr.mxu0 0.0
        %1694 = vmatpush2.msra.mxu0 0.0
        %1695 = vmatprep.subr.mxu0 0.0
        %1696 = vmatpush2.msra.mxu0 0.0
        %1697 = vmatprep.subr.mxu0 0.0
        %1698 = vmatpush2.msra.mxu0 0.0
        %1699 = vmatprep.subr.mxu0 0.0
        %1700 = vmatpush2.msra.mxu0 0.0
        %1701 = vmatprep.subr.mxu0 0.0
        %1702 = vmatpush2.msra.mxu0 0.0
        %1703 = vmatprep.subr.mxu0 0.0
        %1704 = vmatpush2.msra.mxu0 0.0
        %1705 = vmatprep.subr.mxu0 0.0
        %1706 = vmatpush2.msra.mxu0 0.0
        %1707 = vmatprep.subr.mxu0 0.0
        %1708 = vmatpush2.msra.mxu0 0.0
        %1709 = vmatprep.subr.mxu0 0.0
        %1710 = vmatpush2.msra.mxu0 0.0
        %1711 = vmatprep.subr.mxu0 0.0
        %1712 = vmatpush2.msra.mxu0 0.0
        %1713 = vmatprep.subr.mxu0 0.0
        %1714 = vmatpush2.msra.mxu0 0.0
        %1715 = vmatprep.subr.mxu0 0.0
        %1716 = vmatpush2.msra.mxu0 0.0
        %1717 = vmatprep.mubr.f32.mxu0 0.0
        %1718 = vmatmul.mubr.f32.gmra.mxu0 %v1645
        %v1719 = vpop.f32.mrf.mxu0
        %v1720 = vadd.f32 0.0, %v1719
        %v1721 = vpop.f32.mrf.mxu0
        %v1722 = vadd.f32 0.0, %v1721
        %1723 = vdwg.mxu0
        %v1725 = vsel %vm369, %v1640, 0
        %v1728 = vsel %vm369, %v1641, 0
        %1730 = vmatprep.subr.mxu0 0.0
        %1731 = vmatpush1.msra.mxu0 0.0
        %1732 = vmatprep.subr.mxu0 0.0
        %1733 = vmatpush1.msra.mxu0 0.0
        %1734 = vmatprep.subr.mxu0 0.0
        %1735 = vmatpush1.msra.mxu0 0.0
        %1736 = vmatprep.subr.mxu0 0.0
        %1737 = vmatpush1.msra.mxu0 0.0
        %1738 = vmatprep.subr.mxu0 0.0
        %1739 = vmatpush1.msra.mxu0 0.0
        %1740 = vmatprep.subr.mxu0 0.0
        %1741 = vmatpush1.msra.mxu0 0.0
        %1742 = vmatprep.subr.mxu0 0.0
        %1743 = vmatpush1.msra.mxu0 0.0
        %1744 = vmatprep.subr.mxu0 0.0
        %1745 = vmatpush1.msra.mxu0 0.0
        %1746 = vmatprep.subr.mxu0 0.0
        %1747 = vmatpush1.msra.mxu0 0.0
        %1748 = vmatprep.subr.mxu0 0.0
        %1749 = vmatpush1.msra.mxu0 0.0
        %1750 = vmatprep.subr.mxu0 0.0
        %1751 = vmatpush1.msra.mxu0 0.0
        %1752 = vmatprep.subr.mxu0 0.0
        %1753 = vmatpush1.msra.mxu0 0.0
        %1754 = vmatprep.subr.mxu0 0.0
        %1755 = vmatpush1.msra.mxu0 0.0
        %1756 = vmatprep.subr.mxu0 0.0
        %1757 = vmatpush1.msra.mxu0 0.0
        %1758 = vmatprep.subr.mxu0 0.0
        %1759 = vmatpush1.msra.mxu0 0.0
        %1760 = vmatprep.subr.mxu0 %v1728
        %1761 = vmatpush1.msra.mxu0 %v1725
        %1762 = vmatprep.subr.mxu0 0.0
        %1763 = vmatpush2.msra.mxu0 0.0
        %1764 = vmatprep.subr.mxu0 0.0
        %1765 = vmatpush2.msra.mxu0 0.0
        %1766 = vmatprep.subr.mxu0 0.0
        %1767 = vmatpush2.msra.mxu0 0.0
        %1768 = vmatprep.subr.mxu0 0.0
        %1769 = vmatpush2.msra.mxu0 0.0
        %1770 = vmatprep.subr.mxu0 0.0
        %1771 = vmatpush2.msra.mxu0 0.0
        %1772 = vmatprep.subr.mxu0 0.0
        %1773 = vmatpush2.msra.mxu0 0.0
        %1774 = vmatprep.subr.mxu0 0.0
        %1775 = vmatpush2.msra.mxu0 0.0
        %1776 = vmatprep.subr.mxu0 0.0
        %1777 = vmatpush2.msra.mxu0 0.0
        %1778 = vmatprep.subr.mxu0 0.0
        %1779 = vmatpush2.msra.mxu0 0.0
        %1780 = vmatprep.subr.mxu0 0.0
        %1781 = vmatpush2.msra.mxu0 0.0
        %1782 = vmatprep.subr.mxu0 0.0
        %1783 = vmatpush2.msra.mxu0 0.0
        %1784 = vmatprep.subr.mxu0 0.0
        %1785 = vmatpush2.msra.mxu0 0.0
        %1786 = vmatprep.subr.mxu0 0.0
        %1787 = vmatpush2.msra.mxu0 0.0
        %1788 = vmatprep.subr.mxu0 0.0
        %1789 = vmatpush2.msra.mxu0 0.0
        %1790 = vmatprep.subr.mxu0 0.0
        %1791 = vmatpush2.msra.mxu0 0.0
        %1792 = vmatprep.subr.mxu0 0.0
        %1793 = vmatpush2.msra.mxu0 0.0
        %1794 = vmatprep.mubr.f32.mxu0 0.0
        %1795 = vmatmul.mubr.f32.gmra.mxu0 %v1645
        %v1796 = vpop.f32.mrf.mxu0
        %v1797 = vadd.f32 0.0, %v1796
        %v1798 = vpop.f32.mrf.mxu0
        %v1799 = vadd.f32 0.0, %v1798
        %1800 = vdwg.mxu0
        %v1801 = vadd.f32 %v1608, %v1720
        %v1802 = vadd.f32 %v1609, %v1722
        %v1803 = vadd.f32 %v1610, %v1797
        %v1804 = vadd.f32 %v1611, %v1799
        %1805 = vrot.lane.b32.xlu0 %v287, 111
        %v1806 = vpop.permute.xlu0 %1805
        %1807 = vrot.lane.b32.xlu0 %v295, 111
        %v1808 = vpop.permute.xlu0 %1807
        %1809 = vrot.lane.b32.xlu0 %v288, 111
        %v1810 = vpop.permute.xlu0 %1809
        %1811 = vrot.lane.b32.xlu0 %v296, 111
        %v1812 = vpop.permute.xlu0 %1811
        %vm1813 = vcmp.lt.s32.totalorder %v310, 111
        %v1814 = vsel %vm1813, %v1806, %v1810
        %v1815 = vsel %vm1813, %v1808, %v1812
        %v1816 = vsel %vm1813, %v1810, %v1806
        %v1817 = vsel %vm1813, %v1812, %v1808
        %s1818 = scalar_lea.vmem %s2, 16
        %v1819 = vld [vmem:[%s1818] sm:$0x3]
        %v1821 = vlaneseq
        %v1822 = vshrl.u32 %v1821, 7
        %v1823 = vsub.s32 0, %v1822
        %v1824 = vrot.slane %v1819, %v1823
        %v1825 = vlaneseq
        %v1826 = vshrl.u32 %v1825, 7
        %v1827 = vsub.s32 1, %v1826
        %v1828 = vrot.slane %v1819, %v1827
        %v1831 = vmul.f32 %v1814, %v1824
        %v1832 = vmul.f32 %v1816, %v1828
        %v1833 = vmul.f32 %v1815, %v1824
        %v1834 = vmul.f32 %v1817, %v1828
        %s1835 = scalar_lea.vmem %s272, 32
        %v1836 = vld [vmem:[%s1835] sm:$0x7]
        %v1838 = vsel %vm365, %v1836, 0
        %v1841 = vsel %vm369, %v1831, 0
        %v1844 = vsel %vm369, %v1832, 0
        %1846 = vmatprep.subr.mxu0 0.0
        %1847 = vmatpush1.msra.mxu0 0.0
        %1848 = vmatprep.subr.mxu0 0.0
        %1849 = vmatpush1.msra.mxu0 0.0
        %1850 = vmatprep.subr.mxu0 0.0
        %1851 = vmatpush1.msra.mxu0 0.0
        %1852 = vmatprep.subr.mxu0 0.0
        %1853 = vmatpush1.msra.mxu0 0.0
        %1854 = vmatprep.subr.mxu0 0.0
        %1855 = vmatpush1.msra.mxu0 0.0
        %1856 = vmatprep.subr.mxu0 0.0
        %1857 = vmatpush1.msra.mxu0 0.0
        %1858 = vmatprep.subr.mxu0 0.0
        %1859 = vmatpush1.msra.mxu0 0.0
        %1860 = vmatprep.subr.mxu0 0.0
        %1861 = vmatpush1.msra.mxu0 0.0
        %1862 = vmatprep.subr.mxu0 0.0
        %1863 = vmatpush1.msra.mxu0 0.0
        %1864 = vmatprep.subr.mxu0 0.0
        %1865 = vmatpush1.msra.mxu0 0.0
        %1866 = vmatprep.subr.mxu0 0.0
        %1867 = vmatpush1.msra.mxu0 0.0
        %1868 = vmatprep.subr.mxu0 0.0
        %1869 = vmatpush1.msra.mxu0 0.0
        %1870 = vmatprep.subr.mxu0 0.0
        %1871 = vmatpush1.msra.mxu0 0.0
        %1872 = vmatprep.subr.mxu0 0.0
        %1873 = vmatpush1.msra.mxu0 0.0
        %1874 = vmatprep.subr.mxu0 0.0
        %1875 = vmatpush1.msra.mxu0 0.0
        %1876 = vmatprep.subr.mxu0 %v1844
        %1877 = vmatpush1.msra.mxu0 %v1841
        %1878 = vmatprep.subr.mxu0 0.0
        %1879 = vmatpush2.msra.mxu0 0.0
        %1880 = vmatprep.subr.mxu0 0.0
        %1881 = vmatpush2.msra.mxu0 0.0
        %1882 = vmatprep.subr.mxu0 0.0
        %1883 = vmatpush2.msra.mxu0 0.0
        %1884 = vmatprep.subr.mxu0 0.0
        %1885 = vmatpush2.msra.mxu0 0.0
        %1886 = vmatprep.subr.mxu0 0.0
        %1887 = vmatpush2.msra.mxu0 0.0
        %1888 = vmatprep.subr.mxu0 0.0
        %1889 = vmatpush2.msra.mxu0 0.0
        %1890 = vmatprep.subr.mxu0 0.0
        %1891 = vmatpush2.msra.mxu0 0.0
        %1892 = vmatprep.subr.mxu0 0.0
        %1893 = vmatpush2.msra.mxu0 0.0
        %1894 = vmatprep.subr.mxu0 0.0
        %1895 = vmatpush2.msra.mxu0 0.0
        %1896 = vmatprep.subr.mxu0 0.0
        %1897 = vmatpush2.msra.mxu0 0.0
        %1898 = vmatprep.subr.mxu0 0.0
        %1899 = vmatpush2.msra.mxu0 0.0
        %1900 = vmatprep.subr.mxu0 0.0
        %1901 = vmatpush2.msra.mxu0 0.0
        %1902 = vmatprep.subr.mxu0 0.0
        %1903 = vmatpush2.msra.mxu0 0.0
        %1904 = vmatprep.subr.mxu0 0.0
        %1905 = vmatpush2.msra.mxu0 0.0
        %1906 = vmatprep.subr.mxu0 0.0
        %1907 = vmatpush2.msra.mxu0 0.0
        %1908 = vmatprep.subr.mxu0 0.0
        %1909 = vmatpush2.msra.mxu0 0.0
        %1910 = vmatprep.mubr.f32.mxu0 0.0
        %1911 = vmatmul.mubr.f32.gmra.mxu0 %v1838
        %v1912 = vpop.f32.mrf.mxu0
        %v1913 = vadd.f32 0.0, %v1912
        %v1914 = vpop.f32.mrf.mxu0
        %v1915 = vadd.f32 0.0, %v1914
        %1916 = vdwg.mxu0
        %v1918 = vsel %vm369, %v1833, 0
        %v1921 = vsel %vm369, %v1834, 0
        %1923 = vmatprep.subr.mxu0 0.0
        %1924 = vmatpush1.msra.mxu0 0.0
        %1925 = vmatprep.subr.mxu0 0.0
        %1926 = vmatpush1.msra.mxu0 0.0
        %1927 = vmatprep.subr.mxu0 0.0
        %1928 = vmatpush1.msra.mxu0 0.0
        %1929 = vmatprep.subr.mxu0 0.0
        %1930 = vmatpush1.msra.mxu0 0.0
        %1931 = vmatprep.subr.mxu0 0.0
        %1932 = vmatpush1.msra.mxu0 0.0
        %1933 = vmatprep.subr.mxu0 0.0
        %1934 = vmatpush1.msra.mxu0 0.0
        %1935 = vmatprep.subr.mxu0 0.0
        %1936 = vmatpush1.msra.mxu0 0.0
        %1937 = vmatprep.subr.mxu0 0.0
        %1938 = vmatpush1.msra.mxu0 0.0
        %1939 = vmatprep.subr.mxu0 0.0
        %1940 = vmatpush1.msra.mxu0 0.0
        %1941 = vmatprep.subr.mxu0 0.0
        %1942 = vmatpush1.msra.mxu0 0.0
        %1943 = vmatprep.subr.mxu0 0.0
        %1944 = vmatpush1.msra.mxu0 0.0
        %1945 = vmatprep.subr.mxu0 0.0
        %1946 = vmatpush1.msra.mxu0 0.0
        %1947 = vmatprep.subr.mxu0 0.0
        %1948 = vmatpush1.msra.mxu0 0.0
        %1949 = vmatprep.subr.mxu0 0.0
        %1950 = vmatpush1.msra.mxu0 0.0
        %1951 = vmatprep.subr.mxu0 0.0
        %1952 = vmatpush1.msra.mxu0 0.0
        %1953 = vmatprep.subr.mxu0 %v1921
        %1954 = vmatpush1.msra.mxu0 %v1918
        %1955 = vmatprep.subr.mxu0 0.0
        %1956 = vmatpush2.msra.mxu0 0.0
        %1957 = vmatprep.subr.mxu0 0.0
        %1958 = vmatpush2.msra.mxu0 0.0
        %1959 = vmatprep.subr.mxu0 0.0
        %1960 = vmatpush2.msra.mxu0 0.0
        %1961 = vmatprep.subr.mxu0 0.0
        %1962 = vmatpush2.msra.mxu0 0.0
        %1963 = vmatprep.subr.mxu0 0.0
        %1964 = vmatpush2.msra.mxu0 0.0
        %1965 = vmatprep.subr.mxu0 0.0
        %1966 = vmatpush2.msra.mxu0 0.0
        %1967 = vmatprep.subr.mxu0 0.0
        %1968 = vmatpush2.msra.mxu0 0.0
        %1969 = vmatprep.subr.mxu0 0.0
        %1970 = vmatpush2.msra.mxu0 0.0
        %1971 = vmatprep.subr.mxu0 0.0
        %1972 = vmatpush2.msra.mxu0 0.0
        %1973 = vmatprep.subr.mxu0 0.0
        %1974 = vmatpush2.msra.mxu0 0.0
        %1975 = vmatprep.subr.mxu0 0.0
        %1976 = vmatpush2.msra.mxu0 0.0
        %1977 = vmatprep.subr.mxu0 0.0
        %1978 = vmatpush2.msra.mxu0 0.0
        %1979 = vmatprep.subr.mxu0 0.0
        %1980 = vmatpush2.msra.mxu0 0.0
        %1981 = vmatprep.subr.mxu0 0.0
        %1982 = vmatpush2.msra.mxu0 0.0
        %1983 = vmatprep.subr.mxu0 0.0
        %1984 = vmatpush2.msra.mxu0 0.0
        %1985 = vmatprep.subr.mxu0 0.0
        %1986 = vmatpush2.msra.mxu0 0.0
        %1987 = vmatprep.mubr.f32.mxu0 0.0
        %1988 = vmatmul.mubr.f32.gmra.mxu0 %v1838
        %v1989 = vpop.f32.mrf.mxu0
        %v1990 = vadd.f32 0.0, %v1989
        %v1991 = vpop.f32.mrf.mxu0
        %v1992 = vadd.f32 0.0, %v1991
        %1993 = vdwg.mxu0
        %v1994 = vadd.f32 %v1801, %v1913
        %v1995 = vadd.f32 %v1802, %v1915
        %v1996 = vadd.f32 %v1803, %v1990
        %v1997 = vadd.f32 %v1804, %v1992
        %v1998 = vld [vmem:[%s276] sm:$0x7]
        %2000 = vset.pattern.permute.xlu0 0
        %2001 = vperm.xlu0 %2000, %v1998
        %v2002 = vpop.permute.xlu0 %2001
        %v2004 = vadd.f32 %v1994, %v2002
        %v2005 = vadd.f32 %v1995, %v2002
        %v2006 = vadd.f32 %v1996, %v2002
        %v2007 = vadd.f32 %v1997, %v2002
        %v2012 = vcombine.low %v2004, %v2005
        %v2013 = vcombine.low %v2006, %v2007
        %2016 = vst [vmem:[%s267] sm:$0x77] %v2012
        %2017 = vst [vmem:[%s267 + $0x8] sm:$0x77] %v2013
        %s2018 = sand.u32 %s122, 1
        %s2019 = sand.u32 %s122, 1
        %s2020 = smul.addr %s2019, 16
        %s2021 = scalar_lea.vmem [#allocation3], %s2020
        // Predicated region
        $region78: #{tpu_custom_call.1} parent=72 // pred_check
          %p2022 = pneg %p132
        $region79: #{tpu_custom_call.1} parent=72 // pred_check_branch
          %2024 = sbr.rel (%p2022) target = $region81
        $region80: #{tpu_custom_call.1} parent=72 // pred_region
          %s2025 = smul.addr %s15, 2
          %s2026 = smul.addr %s2025, 4
          %s2027 = scalar_lea.vmem %s4, %s2026
          // Predicated region
          $region82: #{tpu_custom_call.1} parent=80 // pred_check
            _
          $region83: #{tpu_custom_call.1} parent=80 // pred_check_branch
            %2029 = sbr.rel (0) target = $region85
          $region84: #{tpu_custom_call.1} parent=80 // pred_region
            // Predicated region
            $region86: #{tpu_custom_call.1} parent=84 // pred_check
              _
            $region87: #{tpu_custom_call.1} parent=84 // pred_check_branch
              %2031 = sbr.rel (0) target = $region89
            $region88: #{tpu_custom_call.1} parent=84 // pred_region
              // Predicated region
              $region101: #{tpu_custom_call.1} parent=88 // pred_check
                _
              $region102: #{tpu_custom_call.1} parent=88 // pred_check_branch
                %2049 = sbr.rel (0) target = $region104
              $region103: #{tpu_custom_call.1} parent=88 // pred_region
                loop: start=0, step=1, limit=1
                $region105: #{tpu_custom_call.1} parent=103 // loop_pre_header
                  _
                $region106: #{tpu_custom_call.1} parent=103 // loop_header
                  %s2051 = sphi 0, %s2055
                  %p2052 = scmp.ge.s32.totalorder %s2051, 1
                  %s2056 = sphi %s2021, %s2021
                  %s2057 = sphi %s2027, %s2027
                $region107: #{tpu_custom_call.1} parent=103 // loop_header_branch
                  %2054 = sbr.rel (%p2052) target = $region111
                $region108: #{tpu_custom_call.1} parent=103 // loop_body
                  %v2058 = vld [vmem:[%s2056] sm:$0xff]
                  %2059 = vst [vmem:[%s2057] sm:$0xff] %v2058
                  %v2060 = vld [vmem:[%s2056 + $0x8] sm:$0xff]
                  %2061 = vst [vmem:[%s2057 + $0x10] sm:$0xff] %v2060
                $region109: #{tpu_custom_call.1} parent=103 // loop_footer
                  %s2055 = sadd.s32 1, %s2051
                $region110: #{tpu_custom_call.1} parent=103 // loop_footer_branch
                  %2050 = sbr.rel target = $region106
                $region111: #{tpu_custom_call.1} parent=103 // loop_exit
                  _
              $region104: #{tpu_custom_call.1} parent=88 // pred_fallthru
                _
              // Predicated region
              $region112: #{tpu_custom_call.1} parent=88 // pred_check
                _
              $region113: #{tpu_custom_call.1} parent=88 // pred_check_branch
                %2063 = sbr.rel target = $region115
              $region114: #{tpu_custom_call.1} parent=88 // pred_region
                _
              $region115: #{tpu_custom_call.1} parent=88 // pred_fallthru
                _
            $region89: #{tpu_custom_call.1} parent=84 // pred_fallthru
              _
            // Predicated region
            $region90: #{tpu_custom_call.1} parent=84 // pred_check
              _
            $region91: #{tpu_custom_call.1} parent=84 // pred_check_branch
              %2033 = sbr.rel target = $region93
            $region92: #{tpu_custom_call.1} parent=84 // pred_region
              %s2035 = ssub.s32 256, 1
              loop: start=0, step=1, limit=1
              $region94: #{tpu_custom_call.1} parent=92 // loop_pre_header
                _
              $region95: #{tpu_custom_call.1} parent=92 // loop_header
                %s2037 = sphi 0, %s2041
                %p2038 = scmp.ge.s32.totalorder %s2037, 1
                %s2042 = sphi %s2021, %s2021
                %s2043 = sphi %s2027, %s2027
              $region96: #{tpu_custom_call.1} parent=92 // loop_header_branch
                %2040 = sbr.rel (%p2038) target = $region100
              $region97: #{tpu_custom_call.1} parent=92 // loop_body
                %v2044 = vld [vmem:[%s2042] sm:%s2035]
                %2045 = vst [vmem:[%s2043] sm:%s2035] %v2044
                %v2046 = vld [vmem:[%s2042 + $0x8] sm:%s2035]
                %2047 = vst [vmem:[%s2043 + $0x10] sm:%s2035] %v2046
              $region98: #{tpu_custom_call.1} parent=92 // loop_footer
                %s2041 = sadd.s32 1, %s2037
              $region99: #{tpu_custom_call.1} parent=92 // loop_footer_branch
                %2036 = sbr.rel target = $region95
              $region100: #{tpu_custom_call.1} parent=92 // loop_exit
                _
            $region93: #{tpu_custom_call.1} parent=84 // pred_fallthru
              _
          $region85: #{tpu_custom_call.1} parent=80 // pred_fallthru
            _
          %2064 = vnop
        $region81: #{tpu_custom_call.1} parent=72 // pred_fallthru
          _
      $region73: #{tpu_custom_call.1} parent=5 // pred_fallthru
        _
      %p2065 = scmp.le.s32.totalorder 2, %s10
      // Predicated region
      $region116: #{tpu_custom_call.1} parent=5 // pred_check
        %p2066 = pneg %p2065
      $region117: #{tpu_custom_call.1} parent=5 // pred_check_branch
        %2068 = sbr.rel (%p2066) target = $region119
      $region118: #{tpu_custom_call.1} parent=5 // pred_region
        %s2069 = ssub.s32 %s10, 2
        // Predicated region
        $region120: #{tpu_custom_call.1} parent=118 // pred_check
          %p2070 = pneg %p138
        $region121: #{tpu_custom_call.1} parent=118 // pred_check_branch
          %2072 = sbr.rel (%p2070) target = $region123
        $region122: #{tpu_custom_call.1} parent=118 // pred_region
          %s2073 = sand.u32 %s123, 1
          %s2074 = sand.u32 %s123, 1
          %s2075 = smul.addr %s2074, 16
          %s2076 = scalar_lea.vmem [#allocation3], %s2075
        $region123: #{tpu_custom_call.1} parent=118 // pred_fallthru
          _
      $region119: #{tpu_custom_call.1} parent=5 // pred_fallthru
        _
    $region6: #{tpu_custom_call.1} parent=1 // loop_footer
      %s14 = sadd.s32 1, %s10
    $region7: #{tpu_custom_call.1} parent=1 // loop_footer_branch
      %9 = sbr.rel target = $region3
    $region8: #{tpu_custom_call.1} parent=1 // loop_exit
      _

</llo_original>
